<compile_context>
chip_gen: v5e
topology: v5e:2x2
jax: 0.10.0
libtpu: 0.0.40
codegen_flags: <defaults>
</compile_context>

<pallas_src>
import jax
import jax.numpy as jnp
from jax.experimental import pallas as pl
from jax.experimental.pallas import tpu as pltpu


NUM_COEFFS = 3  # coef_a, coef_b, sigma  (folded posterior-mean coefficients)


# ----------------------------------------------------------------------------
# Wrapper + kernel (kernel is a closure so tiling constants are compile-time)
# ----------------------------------------------------------------------------
def ddpm_sample(x_nchw, coeffs_flat, temb, noise, w1, wt, b1, w2, b2,
                *, tbn_max=2048, lane_chunk=512, max_unroll=8):
    B, C, Hh, Ww = x_nchw.shape
    T, _ = temb.shape
    Hd = w1.shape[1]
    BN = B * Hh * Ww
    assert noise.shape == (T, C, BN)
    assert coeffs_flat.shape == (T * NUM_COEFFS,)

    # --- tiling choices ------------------------------------------------------
    tbn = min(tbn_max, BN)
    assert tbn % 128 == 0 and BN % tbn == 0, "pixel tile must be lane-aligned and divide B*H*W"

    # lane sub-chunk for compute (keeps h = (Hd, chunk) f32 near the vreg file)
    chunk = min(lane_chunk, tbn)
    while tbn % chunk != 0:
        chunk -= 128
    n_chunks = tbn // chunk

    # Tt timesteps per grid step: largest divisor of T up to max_unroll, so that
    #  * the per-grid-step noise DMA is Tt*C*tbn*2 bytes (amortizes fixed overhead),
    #  * Tt*C fills >= 8 sublanes of the noise tile (dense (8,128) packing),
    #  * the static in-kernel unroll stays modest.
    tt = 1
    for d in range(1, T + 1):
        if T % d == 0 and d <= max_unroll:
            tt = d
    n_tsteps = T // tt

    # --- host-side layout plumbing -------------------------------------------
    x_cm = jnp.transpose(x_nchw, (1, 0, 2, 3)).reshape(C, BN)          # (C, BN)
    # bf16 noise halves the dominant HBM stream; fold Tt into sublanes for dense DMA.
    noise_rs = noise.astype(jnp.bfloat16).reshape(n_tsteps, tt * C, BN)
    # Hoist the time-embedding branch: per-step (Hd, 1) additive bias, resident table.
    # (For very large T this table should be re-blocked per time step instead —
    #  each (Hd, 1) column pads to 128 lanes in VMEM.)
    temb_proj = (temb @ wt + b1).reshape(T, Hd, 1).astype(jnp.float32)
    w1t = jnp.transpose(w1)            # (Hd, C)
    w2t = jnp.transpose(w2)            # (C, Hd)
    b2c = b2.reshape(C, 1)             # (C, 1)

    def kernel(coeff_ref,    # SMEM (T*3,) scalar prefetch: coef_a, coef_b, sigma per step
               x_ref,        # VMEM (C, tbn)        x_T for pixel tile j
               temb_ref,     # VMEM (T, Hd, 1)      resident temb@wt+b1 table
               noise_ref,    # VMEM (1, Tt*C, tbn)  bf16 noise for grid step (i, j)
               w1t_ref,      # VMEM (Hd, C)
               w2t_ref,      # VMEM (C, Hd)
               b2_ref,       # VMEM (C, 1)
               out_ref):     # VMEM (C, tbn)        resident x_t accumulator
        i = pl.program_id(1)           # time grid step; covers t = T-1-i*tt ... downward

        # Initialize the resident accumulator with x_T on the first time step.
        @pl.when(i == 0)
        def _():
            out_ref[...] = x_ref[...]

        w1t_v = w1t_ref[...]
        w2t_v = w2t_ref[...]
        b2_v = b2_ref[...]

        for ci in range(n_chunks):                       # static lane chunks
            c0, c1 = ci * chunk, (ci + 1) * chunk
            # whole noise block for this chunk, upcast once: (Tt*C, chunk) f32
            nblk = noise_ref[0, :, c0:c1].astype(jnp.float32)
            xt = out_ref[:, c0:c1]                       # (C, chunk)
            for s in range(tt):                          # static unrolled sub-steps
                t_idx = i * tt + s
                # inner model: per-pixel (1x1-conv) MLP, lane-dense
                h = jnp.maximum(
                    jnp.dot(w1t_v, xt, preferred_element_type=jnp.float32)
                    + temb_ref[t_idx],                   # (Hd, 1) bcast over pixels
                    0.0,
                )                                        # (Hd, chunk)
                pred = (jnp.dot(w2t_v, h, preferred_element_type=jnp.float32)
                        + b2_v)                          # (C, chunk) == eps_theta

                base = t_idx * NUM_COEFFS
                coef_a = coeff_ref[base + 0]             # pm_coef1/sqrt(ac) + pm_coef2
                coef_b = coeff_ref[base + 1]             # pm_coef1*sqrt(1/ac - 1)
                sigma = coeff_ref[base + 2]              # (t!=0) * exp(0.5*logvar)

                nz = nblk[s * C:(s + 1) * C]             # (C, chunk)
                xt = coef_a * xt - coef_b * pred + sigma * nz
            out_ref[:, c0:c1] = xt

    grid = (BN // tbn, n_tsteps)       # (pixel tiles [parallel], time [sequential])

    grid_spec = pltpu.PrefetchScalarGridSpec(
        num_scalar_prefetch=1,
        grid=grid,
        in_specs=[
            pl.BlockSpec((C, tbn),         lambda j, i, c: (0, j)),        # x_T (once per tile)
            pl.BlockSpec((T, Hd, 1),       lambda j, i, c: (0, 0, 0)),     # temb table (resident)
            pl.BlockSpec((1, tt * C, tbn), lambda j, i, c: (i, 0, j)),     # noise (streamed bf16)
            pl.BlockSpec((Hd, C),          lambda j, i, c: (0, 0)),        # w1.T (resident)
            pl.BlockSpec((C, Hd),          lambda j, i, c: (0, 0)),        # w2.T (resident)
            pl.BlockSpec((C, 1),           lambda j, i, c: (0, 0)),        # b2   (resident)
        ],
        out_specs=pl.BlockSpec((C, tbn), lambda j, i, c: (0, j)),          # resident across time
    )

    out_cm = pl.pallas_call(
        kernel,
        out_shape=jax.ShapeDtypeStruct((C, BN), jnp.float32),
        grid_spec=grid_spec,
        compiler_params=pltpu.CompilerParams(
            # time axis is inherently sequential; pixel-tile axis is parallel.
            dimension_semantics=("parallel", "arbitrary"),
            # plenty of headroom on every generation (v7x has 64 MiB/TC physical).
            vmem_limit_bytes=32 * 1024 * 1024,
        ),
    )(coeffs_flat, x_cm, temb_proj, noise_rs, w1t, w2t, b2c)

    return jnp.transpose(out_cm.reshape(C, B, Hh, Ww), (1, 0, 2, 3))


# ----------------------------------------------------------------------------
# Pure-JAX reference: original (un-folded) predict_x0 + q_posterior math
# ----------------------------------------------------------------------------
def ddpm_sample_ref(x_nchw, ref_coeffs, temb, noise_bf16, w1, wt, b1, w2, b2):
    B, C, Hh, Ww = x_nchw.shape
    T = temb.shape[0]
    BN = B * Hh * Ww
    xt = jnp.transpose(x_nchw, (1, 0, 2, 3)).reshape(C, BN)    # (C, BN)
    noise = noise_bf16.astype(jnp.float32)                     # same values the kernel sees

    def step(i, xt):
        te = temb[i][None, :] @ wt + b1                        # (1, Hd)
        h = jnp.maximum(w1.T @ xt + te.T, 0.0)                 # (Hd, BN)
        pred = w2.T @ h + b2.T                                 # (C, BN)
        c = ref_coeffs[i]
        x0 = c[0] * xt - c[1] * pred                           # predictor.predict_x0
        mean = c[2] * x0 + c[3] * xt                           # schedule.q_posterior (mean)
        return mean + c[4] * noise[i]                          # + nonzero_mask*sigma*noise

    xt = jax.lax.fori_loop(0, T, step, xt)
    return jnp.transpose(xt.reshape(C, B, Hh, Ww), (1, 0, 2, 3))


# ----------------------------------------------------------------------------
# Deterministic setup: schedule, model weights, inputs
# ----------------------------------------------------------------------------
def build_schedule_coeffs(T):
    # DiscreteGaussianSchedule with a linear beta schedule, eval_steps=None
    betas = jnp.linspace(1e-4, 2e-2, T, dtype=jnp.float32)
    alphas = 1.0 - betas
    ac = jnp.cumprod(alphas)
    ac_prev = jnp.concatenate([jnp.ones((1,), jnp.float32), ac[:-1]])

    sqrt_recip_ac = 1.0 / jnp.sqrt(ac)
    sqrt_recipm1_ac = jnp.sqrt(1.0 / ac - 1.0)
    post_var = betas * (1.0 - ac_prev) / (1.0 - ac)
    post_log_var_clipped = jnp.log(jnp.concatenate([post_var[1:2], post_var[1:]]))
    pm_coef1 = betas * jnp.sqrt(ac_prev) / (1.0 - ac)
    pm_coef2 = (1.0 - ac_prev) * jnp.sqrt(alphas) / (1.0 - ac)

    # Reverse-time order: grid index maps to t = T-1, T-2, ..., 0
    t_rev = jnp.arange(T - 1, -1, -1)
    sigma = (t_rev != 0).astype(jnp.float32) * jnp.exp(0.5 * post_log_var_clipped[t_rev])

    # Raw 5-coeff table (reverse order) for the reference implementation.
    ref_coeffs = jnp.stack(
        [sqrt_recip_ac[t_rev], sqrt_recipm1_ac[t_rev],
         pm_coef1[t_rev], pm_coef2[t_rev], sigma],
        axis=1).astype(jnp.float32)                            # (T, 5)

    # Folded 3-coeff table for the kernel:
    #   x_{t-1} = coef_a * x_t - coef_b * eps_theta + sigma * noise
    coef_a = pm_coef1 * sqrt_recip_ac + pm_coef2
    coef_b = pm_coef1 * sqrt_recipm1_ac
    coeffs = jnp.stack([coef_a[t_rev], coef_b[t_rev], sigma], axis=1).astype(jnp.float32)
    # Flatten to 1-D for SMEM (avoids the [8, 128]-word 2-D SMEM padding).
    return coeffs.reshape(-1), ref_coeffs, t_rev


def timestep_embedding(t_rev, E):
    # Simple sinusoidal embedding of the (reverse-ordered) timesteps, (T, E)
    half = E // 2
    freqs = jnp.exp(-jnp.log(1000.0) * jnp.arange(half, dtype=jnp.float32) / half)
    args = t_rev.astype(jnp.float32)[:, None] * freqs[None, :]
    return jnp.concatenate([jnp.sin(args), jnp.cos(args)], axis=1).astype(jnp.float32)


if __name__ == "__main__":
    B, C, Hh, Ww = 2, 4, 16, 16        # image shape (NCHW, like the PyTorch module)
    T = 8                              # schedule.steps (== eval_steps)
    E, Hd = 32, 32                     # time-embedding dim, hidden dim of inner model
    BN = B * Hh * Ww                   # 512 pixels

    key = jax.random.PRNGKey(0)
    k_x, k_n, k_w1, k_wt, k_w2 = jax.random.split(key, 5)

    # x_T ~ N(0, I)  (eval-mode forward starts from noise)
    x = jax.random.normal(k_x, (B, C, Hh, Ww), dtype=jnp.float32)
    # schedule.sample_noise draws, pre-sampled per step, lane-dense (T, C, BN), bf16 stream
    noise = jax.random.normal(k_n, (T, C, BN), dtype=jnp.float32)
    noise_bf16 = noise.astype(jnp.bfloat16)

    coeffs_flat, ref_coeffs, t_rev = build_schedule_coeffs(T)
    temb = timestep_embedding(t_rev, E)

    # Deterministic inner-model ("model" in DDPModule.__init__) weights
    w1 = 0.1 * jax.random.normal(k_w1, (C, Hd), dtype=jnp.float32)
    wt = 0.1 * jax.random.normal(k_wt, (E, Hd), dtype=jnp.float32)
    b1 = jnp.zeros((1, Hd), dtype=jnp.float32)
    w2 = 0.1 * jax.random.normal(k_w2, (Hd, C), dtype=jnp.float32)
    b2 = jnp.zeros((1, C), dtype=jnp.float32)

    out = ddpm_sample(x, coeffs_flat, temb, noise_bf16, w1, wt, b1, w2, b2)
    out = jax.block_until_ready(out)

    ref = jax.block_until_ready(
        ddpm_sample_ref(x, ref_coeffs, temb, noise_bf16, w1, wt, b1, w2, b2))
    assert out.shape == (B, C, Hh, Ww)
    assert jnp.allclose(out, ref, rtol=1e-3, atol=1e-3), "mismatch vs JAX reference"

    print("KERNEL_OK")
</pallas_src>

<mosaic_0001>
module attributes {stable_mosaic.version = 11 : i64} {
  func.func @kernel(%arg0: i32, %arg1: i32, %arg2: memref<24xf32, #tpu.memory_space<smem>>, %arg3: memref<4x512xf32, #tpu.memory_space<vmem>>, %arg4: memref<8x32x1xf32, #tpu.memory_space<vmem>>, %arg5: memref<1x32x512xbf16, #tpu.memory_space<vmem>>, %arg6: memref<32x4xf32, #tpu.memory_space<vmem>>, %arg7: memref<4x32xf32, #tpu.memory_space<vmem>>, %arg8: memref<4x1xf32, #tpu.memory_space<vmem>>, %arg9: memref<4x512xf32, #tpu.memory_space<vmem>>) attributes {dimension_semantics = [#tpu.dimension_semantics<parallel>, #tpu.dimension_semantics<arbitrary>], iteration_bounds = array<i64: 1, 1>, scalar_prefetch = 1 : i64, scratch_operands = 0 : i64, tpu.core_type = #tpu.core_type<tc>, window_params = [{transform_indices = @transform_0, window_bounds = array<i64: 4, 512>}, {pipeline_mode = #tpu.pipeline_mode<synchronous>, transform_indices = @transform_1, window_bounds = array<i64: 8, 32, 1>}, {transform_indices = @transform_2, window_bounds = array<i64: 1, 32, 512>}, {pipeline_mode = #tpu.pipeline_mode<synchronous>, transform_indices = @transform_3, window_bounds = array<i64: 32, 4>}, {pipeline_mode = #tpu.pipeline_mode<synchronous>, transform_indices = @transform_4, window_bounds = array<i64: 4, 32>}, {pipeline_mode = #tpu.pipeline_mode<synchronous>, transform_indices = @transform_5, window_bounds = array<i64: 4, 1>}, {transform_indices = @transform_6, window_bounds = array<i64: 4, 512>}]} {
    %c0_i32 = arith.constant 0 : i32
    %0 = arith.cmpi eq, %arg1, %c0_i32 : i32
    %1 = arith.extui %0 : i1 to i32
    %c0_i32_0 = arith.constant 0 : i32
    %2 = arith.cmpi ne, %1, %c0_i32_0 : i32
    scf.if %2 {
      %c0_92 = arith.constant 0 : index
      %c0_93 = arith.constant 0 : index
      %267 = vector.load %arg3[%c0_92, %c0_93] : memref<4x512xf32, #tpu.memory_space<vmem>>, vector<4x512xf32>
      %c0_94 = arith.constant 0 : index
      %c0_95 = arith.constant 0 : index
      %268 = vector.load %arg9[%c0_94, %c0_95] : memref<4x512xf32, #tpu.memory_space<vmem>>, vector<4x512xf32>
      tpu.vector_store %arg9[%c0_94, %c0_95], %267 {strides = array<i32>} : memref<4x512xf32, #tpu.memory_space<vmem>>, vector<4x512xf32>,
    } else {
    }
    %c0 = arith.constant 0 : index
    %c0_1 = arith.constant 0 : index
    %3 = vector.load %arg6[%c0, %c0_1] : memref<32x4xf32, #tpu.memory_space<vmem>>, vector<32x4xf32>
    %c0_2 = arith.constant 0 : index
    %c0_3 = arith.constant 0 : index
    %4 = vector.load %arg7[%c0_2, %c0_3] : memref<4x32xf32, #tpu.memory_space<vmem>>, vector<4x32xf32>
    %c0_4 = arith.constant 0 : index
    %c0_5 = arith.constant 0 : index
    %5 = vector.load %arg8[%c0_4, %c0_5] : memref<4x1xf32, #tpu.memory_space<vmem>>, vector<4x1xf32>
    %c0_6 = arith.constant 0 : index
    %c0_7 = arith.constant 0 : index
    %c0_8 = arith.constant 0 : index
    %6 = vector.load %arg5[%c0_6, %c0_7, %c0_8] : memref<1x32x512xbf16, #tpu.memory_space<vmem>>, vector<1x32x512xbf16>
    %7 = vector.shape_cast %6 : vector<1x32x512xbf16> to vector<32x512xbf16>
    %8 = arith.extf %7 : vector<32x512xbf16> to vector<32x512xf32>
    %c0_9 = arith.constant 0 : index
    %c0_10 = arith.constant 0 : index
    %9 = vector.load %arg9[%c0_9, %c0_10] : memref<4x512xf32, #tpu.memory_space<vmem>>, vector<4x512xf32>
    %c8_i32 = arith.constant 8 : i32
    %10 = arith.muli %arg1, %c8_i32 : i32
    %c0_i32_11 = arith.constant 0 : i32
    %11 = arith.addi %10, %c0_i32_11 : i32
    %cst = arith.constant dense<0.000000e+00> : vector<32x512xf32>
    %12 = tpu.matmul %3, %9, %cst {dimension_numbers = #tpu.dot_dimension_numbers<[1], [0], [0], [1], [0, 0, 1, 1], [], []>} : vector<32x4xf32>, vector<4x512xf32>, vector<32x512xf32> -> vector<32x512xf32>
    %13 = arith.index_cast %11 : i32 to index
    %c0_12 = arith.constant 0 : index
    %c0_13 = arith.constant 0 : index
    %14 = vector.load %arg4[%13, %c0_12, %c0_13] : memref<8x32x1xf32, #tpu.memory_space<vmem>>, vector<1x32x1xf32>
    %15 = vector.shape_cast %14 : vector<1x32x1xf32> to vector<32x1xf32>
    %16 = vector.broadcast %15 : vector<32x1xf32> to vector<32x512xf32>
    %17 = arith.addf %12, %16 : vector<32x512xf32>
    %cst_14 = arith.constant 0.000000e+00 : f32
    %18 = vector.broadcast %cst_14 : f32 to vector<32x512xf32>
    %19 = arith.maximumf %17, %18 : vector<32x512xf32>
    %cst_15 = arith.constant dense<0.000000e+00> : vector<4x512xf32>
    %20 = tpu.matmul %4, %19, %cst_15 {dimension_numbers = #tpu.dot_dimension_numbers<[1], [0], [0], [1], [0, 0, 1, 1], [], []>} : vector<4x32xf32>, vector<32x512xf32>, vector<4x512xf32> -> vector<4x512xf32>
    %21 = vector.broadcast %5 : vector<4x1xf32> to vector<4x512xf32>
    %22 = arith.addf %20, %21 : vector<4x512xf32>
    %c3_i32 = arith.constant 3 : i32
    %23 = arith.muli %11, %c3_i32 : i32
    %c0_i32_16 = arith.constant 0 : i32
    %24 = arith.addi %23, %c0_i32_16 : i32
    %25 = arith.index_cast %24 : i32 to index
    %26 = memref.load %arg2[%25] : memref<24xf32, #tpu.memory_space<smem>>
    %c1_i32 = arith.constant 1 : i32
    %27 = arith.addi %23, %c1_i32 : i32
    %28 = arith.index_cast %27 : i32 to index
    %29 = memref.load %arg2[%28] : memref<24xf32, #tpu.memory_space<smem>>
    %c2_i32 = arith.constant 2 : i32
    %30 = arith.addi %23, %c2_i32 : i32
    %31 = arith.index_cast %30 : i32 to index
    %32 = memref.load %arg2[%31] : memref<24xf32, #tpu.memory_space<smem>>
    %33 = vector.extract_strided_slice %8 {offsets = [0, 0], sizes = [4, 512], strides = [1, 1]} : vector<32x512xf32> to vector<4x512xf32>
    %34 = vector.broadcast %26 : f32 to vector<4x512xf32>
    %35 = arith.mulf %34, %9 : vector<4x512xf32>
    %36 = vector.broadcast %29 : f32 to vector<4x512xf32>
    %37 = arith.mulf %36, %22 : vector<4x512xf32>
    %38 = arith.subf %35, %37 : vector<4x512xf32>
    %39 = vector.broadcast %32 : f32 to vector<4x512xf32>
    %40 = arith.mulf %39, %33 : vector<4x512xf32>
    %41 = arith.addf %38, %40 : vector<4x512xf32>
    %c8_i32_17 = arith.constant 8 : i32
    %42 = arith.muli %arg1, %c8_i32_17 : i32
    %c1_i32_18 = arith.constant 1 : i32
    %43 = arith.addi %42, %c1_i32_18 : i32
    %cst_19 = arith.constant dense<0.000000e+00> : vector<32x512xf32>
    %44 = tpu.matmul %3, %41, %cst_19 {dimension_numbers = #tpu.dot_dimension_numbers<[1], [0], [0], [1], [0, 0, 1, 1], [], []>} : vector<32x4xf32>, vector<4x512xf32>, vector<32x512xf32> -> vector<32x512xf32>
    %45 = arith.index_cast %43 : i32 to index
    %c0_20 = arith.constant 0 : index
    %c0_21 = arith.constant 0 : index
    %46 = vector.load %arg4[%45, %c0_20, %c0_21] : memref<8x32x1xf32, #tpu.memory_space<vmem>>, vector<1x32x1xf32>
    %47 = vector.shape_cast %46 : vector<1x32x1xf32> to vector<32x1xf32>
    %48 = vector.broadcast %47 : vector<32x1xf32> to vector<32x512xf32>
    %49 = arith.addf %44, %48 : vector<32x512xf32>
    %cst_22 = arith.constant 0.000000e+00 : f32
    %50 = vector.broadcast %cst_22 : f32 to vector<32x512xf32>
    %51 = arith.maximumf %49, %50 : vector<32x512xf32>
    %cst_23 = arith.constant dense<0.000000e+00> : vector<4x512xf32>
    %52 = tpu.matmul %4, %51, %cst_23 {dimension_numbers = #tpu.dot_dimension_numbers<[1], [0], [0], [1], [0, 0, 1, 1], [], []>} : vector<4x32xf32>, vector<32x512xf32>, vector<4x512xf32> -> vector<4x512xf32>
    %53 = vector.broadcast %5 : vector<4x1xf32> to vector<4x512xf32>
    %54 = arith.addf %52, %53 : vector<4x512xf32>
    %c3_i32_24 = arith.constant 3 : i32
    %55 = arith.muli %43, %c3_i32_24 : i32
    %c0_i32_25 = arith.constant 0 : i32
    %56 = arith.addi %55, %c0_i32_25 : i32
    %57 = arith.index_cast %56 : i32 to index
    %58 = memref.load %arg2[%57] : memref<24xf32, #tpu.memory_space<smem>>
    %c1_i32_26 = arith.constant 1 : i32
    %59 = arith.addi %55, %c1_i32_26 : i32
    %60 = arith.index_cast %59 : i32 to index
    %61 = memref.load %arg2[%60] : memref<24xf32, #tpu.memory_space<smem>>
    %c2_i32_27 = arith.constant 2 : i32
    %62 = arith.addi %55, %c2_i32_27 : i32
    %63 = arith.index_cast %62 : i32 to index
    %64 = memref.load %arg2[%63] : memref<24xf32, #tpu.memory_space<smem>>
    %65 = vector.extract_strided_slice %8 {offsets = [4, 0], sizes = [4, 512], strides = [1, 1]} : vector<32x512xf32> to vector<4x512xf32>
    %66 = vector.broadcast %58 : f32 to vector<4x512xf32>
    %67 = arith.mulf %66, %41 : vector<4x512xf32>
    %68 = vector.broadcast %61 : f32 to vector<4x512xf32>
    %69 = arith.mulf %68, %54 : vector<4x512xf32>
    %70 = arith.subf %67, %69 : vector<4x512xf32>
    %71 = vector.broadcast %64 : f32 to vector<4x512xf32>
    %72 = arith.mulf %71, %65 : vector<4x512xf32>
    %73 = arith.addf %70, %72 : vector<4x512xf32>
    %c8_i32_28 = arith.constant 8 : i32
    %74 = arith.muli %arg1, %c8_i32_28 : i32
    %c2_i32_29 = arith.constant 2 : i32
    %75 = arith.addi %74, %c2_i32_29 : i32
    %cst_30 = arith.constant dense<0.000000e+00> : vector<32x512xf32>
    %76 = tpu.matmul %3, %73, %cst_30 {dimension_numbers = #tpu.dot_dimension_numbers<[1], [0], [0], [1], [0, 0, 1, 1], [], []>} : vector<32x4xf32>, vector<4x512xf32>, vector<32x512xf32> -> vector<32x512xf32>
    %77 = arith.index_cast %75 : i32 to index
    %c0_31 = arith.constant 0 : index
    %c0_32 = arith.constant 0 : index
    %78 = vector.load %arg4[%77, %c0_31, %c0_32] : memref<8x32x1xf32, #tpu.memory_space<vmem>>, vector<1x32x1xf32>
    %79 = vector.shape_cast %78 : vector<1x32x1xf32> to vector<32x1xf32>
    %80 = vector.broadcast %79 : vector<32x1xf32> to vector<32x512xf32>
    %81 = arith.addf %76, %80 : vector<32x512xf32>
    %cst_33 = arith.constant 0.000000e+00 : f32
    %82 = vector.broadcast %cst_33 : f32 to vector<32x512xf32>
    %83 = arith.maximumf %81, %82 : vector<32x512xf32>
    %cst_34 = arith.constant dense<0.000000e+00> : vector<4x512xf32>
    %84 = tpu.matmul %4, %83, %cst_34 {dimension_numbers = #tpu.dot_dimension_numbers<[1], [0], [0], [1], [0, 0, 1, 1], [], []>} : vector<4x32xf32>, vector<32x512xf32>, vector<4x512xf32> -> vector<4x512xf32>
    %85 = vector.broadcast %5 : vector<4x1xf32> to vector<4x512xf32>
    %86 = arith.addf %84, %85 : vector<4x512xf32>
    %c3_i32_35 = arith.constant 3 : i32
    %87 = arith.muli %75, %c3_i32_35 : i32
    %c0_i32_36 = arith.constant 0 : i32
    %88 = arith.addi %87, %c0_i32_36 : i32
    %89 = arith.index_cast %88 : i32 to index
    %90 = memref.load %arg2[%89] : memref<24xf32, #tpu.memory_space<smem>>
    %c1_i32_37 = arith.constant 1 : i32
    %91 = arith.addi %87, %c1_i32_37 : i32
    %92 = arith.index_cast %91 : i32 to index
    %93 = memref.load %arg2[%92] : memref<24xf32, #tpu.memory_space<smem>>
    %c2_i32_38 = arith.constant 2 : i32
    %94 = arith.addi %87, %c2_i32_38 : i32
    %95 = arith.index_cast %94 : i32 to index
    %96 = memref.load %arg2[%95] : memref<24xf32, #tpu.memory_space<smem>>
    %97 = vector.extract_strided_slice %8 {offsets = [8, 0], sizes = [4, 512], strides = [1, 1]} : vector<32x512xf32> to vector<4x512xf32>
    %98 = vector.broadcast %90 : f32 to vector<4x512xf32>
    %99 = arith.mulf %98, %73 : vector<4x512xf32>
    %100 = vector.broadcast %93 : f32 to vector<4x512xf32>
    %101 = arith.mulf %100, %86 : vector<4x512xf32>
    %102 = arith.subf %99, %101 : vector<4x512xf32>
    %103 = vector.broadcast %96 : f32 to vector<4x512xf32>
    %104 = arith.mulf %103, %97 : vector<4x512xf32>
    %105 = arith.addf %102, %104 : vector<4x512xf32>
    %c8_i32_39 = arith.constant 8 : i32
    %106 = arith.muli %arg1, %c8_i32_39 : i32
    %c3_i32_40 = arith.constant 3 : i32
    %107 = arith.addi %106, %c3_i32_40 : i32
    %cst_41 = arith.constant dense<0.000000e+00> : vector<32x512xf32>
    %108 = tpu.matmul %3, %105, %cst_41 {dimension_numbers = #tpu.dot_dimension_numbers<[1], [0], [0], [1], [0, 0, 1, 1], [], []>} : vector<32x4xf32>, vector<4x512xf32>, vector<32x512xf32> -> vector<32x512xf32>
    %109 = arith.index_cast %107 : i32 to index
    %c0_42 = arith.constant 0 : index
    %c0_43 = arith.constant 0 : index
    %110 = vector.load %arg4[%109, %c0_42, %c0_43] : memref<8x32x1xf32, #tpu.memory_space<vmem>>, vector<1x32x1xf32>
    %111 = vector.shape_cast %110 : vector<1x32x1xf32> to vector<32x1xf32>
    %112 = vector.broadcast %111 : vector<32x1xf32> to vector<32x512xf32>
    %113 = arith.addf %108, %112 : vector<32x512xf32>
    %cst_44 = arith.constant 0.000000e+00 : f32
    %114 = vector.broadcast %cst_44 : f32 to vector<32x512xf32>
    %115 = arith.maximumf %113, %114 : vector<32x512xf32>
    %cst_45 = arith.constant dense<0.000000e+00> : vector<4x512xf32>
    %116 = tpu.matmul %4, %115, %cst_45 {dimension_numbers = #tpu.dot_dimension_numbers<[1], [0], [0], [1], [0, 0, 1, 1], [], []>} : vector<4x32xf32>, vector<32x512xf32>, vector<4x512xf32> -> vector<4x512xf32>
    %117 = vector.broadcast %5 : vector<4x1xf32> to vector<4x512xf32>
    %118 = arith.addf %116, %117 : vector<4x512xf32>
    %c3_i32_46 = arith.constant 3 : i32
    %119 = arith.muli %107, %c3_i32_46 : i32
    %c0_i32_47 = arith.constant 0 : i32
    %120 = arith.addi %119, %c0_i32_47 : i32
    %121 = arith.index_cast %120 : i32 to index
    %122 = memref.load %arg2[%121] : memref<24xf32, #tpu.memory_space<smem>>
    %c1_i32_48 = arith.constant 1 : i32
    %123 = arith.addi %119, %c1_i32_48 : i32
    %124 = arith.index_cast %123 : i32 to index
    %125 = memref.load %arg2[%124] : memref<24xf32, #tpu.memory_space<smem>>
    %c2_i32_49 = arith.constant 2 : i32
    %126 = arith.addi %119, %c2_i32_49 : i32
    %127 = arith.index_cast %126 : i32 to index
    %128 = memref.load %arg2[%127] : memref<24xf32, #tpu.memory_space<smem>>
    %129 = vector.extract_strided_slice %8 {offsets = [12, 0], sizes = [4, 512], strides = [1, 1]} : vector<32x512xf32> to vector<4x512xf32>
    %130 = vector.broadcast %122 : f32 to vector<4x512xf32>
    %131 = arith.mulf %130, %105 : vector<4x512xf32>
    %132 = vector.broadcast %125 : f32 to vector<4x512xf32>
    %133 = arith.mulf %132, %118 : vector<4x512xf32>
    %134 = arith.subf %131, %133 : vector<4x512xf32>
    %135 = vector.broadcast %128 : f32 to vector<4x512xf32>
    %136 = arith.mulf %135, %129 : vector<4x512xf32>
    %137 = arith.addf %134, %136 : vector<4x512xf32>
    %c8_i32_50 = arith.constant 8 : i32
    %138 = arith.muli %arg1, %c8_i32_50 : i32
    %c4_i32 = arith.constant 4 : i32
    %139 = arith.addi %138, %c4_i32 : i32
    %cst_51 = arith.constant dense<0.000000e+00> : vector<32x512xf32>
    %140 = tpu.matmul %3, %137, %cst_51 {dimension_numbers = #tpu.dot_dimension_numbers<[1], [0], [0], [1], [0, 0, 1, 1], [], []>} : vector<32x4xf32>, vector<4x512xf32>, vector<32x512xf32> -> vector<32x512xf32>
    %141 = arith.index_cast %139 : i32 to index
    %c0_52 = arith.constant 0 : index
    %c0_53 = arith.constant 0 : index
    %142 = vector.load %arg4[%141, %c0_52, %c0_53] : memref<8x32x1xf32, #tpu.memory_space<vmem>>, vector<1x32x1xf32>
    %143 = vector.shape_cast %142 : vector<1x32x1xf32> to vector<32x1xf32>
    %144 = vector.broadcast %143 : vector<32x1xf32> to vector<32x512xf32>
    %145 = arith.addf %140, %144 : vector<32x512xf32>
    %cst_54 = arith.constant 0.000000e+00 : f32
    %146 = vector.broadcast %cst_54 : f32 to vector<32x512xf32>
    %147 = arith.maximumf %145, %146 : vector<32x512xf32>
    %cst_55 = arith.constant dense<0.000000e+00> : vector<4x512xf32>
    %148 = tpu.matmul %4, %147, %cst_55 {dimension_numbers = #tpu.dot_dimension_numbers<[1], [0], [0], [1], [0, 0, 1, 1], [], []>} : vector<4x32xf32>, vector<32x512xf32>, vector<4x512xf32> -> vector<4x512xf32>
    %149 = vector.broadcast %5 : vector<4x1xf32> to vector<4x512xf32>
    %150 = arith.addf %148, %149 : vector<4x512xf32>
    %c3_i32_56 = arith.constant 3 : i32
    %151 = arith.muli %139, %c3_i32_56 : i32
    %c0_i32_57 = arith.constant 0 : i32
    %152 = arith.addi %151, %c0_i32_57 : i32
    %153 = arith.index_cast %152 : i32 to index
    %154 = memref.load %arg2[%153] : memref<24xf32, #tpu.memory_space<smem>>
    %c1_i32_58 = arith.constant 1 : i32
    %155 = arith.addi %151, %c1_i32_58 : i32
    %156 = arith.index_cast %155 : i32 to index
    %157 = memref.load %arg2[%156] : memref<24xf32, #tpu.memory_space<smem>>
    %c2_i32_59 = arith.constant 2 : i32
    %158 = arith.addi %151, %c2_i32_59 : i32
    %159 = arith.index_cast %158 : i32 to index
    %160 = memref.load %arg2[%159] : memref<24xf32, #tpu.memory_space<smem>>
    %161 = vector.extract_strided_slice %8 {offsets = [16, 0], sizes = [4, 512], strides = [1, 1]} : vector<32x512xf32> to vector<4x512xf32>
    %162 = vector.broadcast %154 : f32 to vector<4x512xf32>
    %163 = arith.mulf %162, %137 : vector<4x512xf32>
    %164 = vector.broadcast %157 : f32 to vector<4x512xf32>
    %165 = arith.mulf %164, %150 : vector<4x512xf32>
    %166 = arith.subf %163, %165 : vector<4x512xf32>
    %167 = vector.broadcast %160 : f32 to vector<4x512xf32>
    %168 = arith.mulf %167, %161 : vector<4x512xf32>
    %169 = arith.addf %166, %168 : vector<4x512xf32>
    %c8_i32_60 = arith.constant 8 : i32
    %170 = arith.muli %arg1, %c8_i32_60 : i32
    %c5_i32 = arith.constant 5 : i32
    %171 = arith.addi %170, %c5_i32 : i32
    %cst_61 = arith.constant dense<0.000000e+00> : vector<32x512xf32>
    %172 = tpu.matmul %3, %169, %cst_61 {dimension_numbers = #tpu.dot_dimension_numbers<[1], [0], [0], [1], [0, 0, 1, 1], [], []>} : vector<32x4xf32>, vector<4x512xf32>, vector<32x512xf32> -> vector<32x512xf32>
    %173 = arith.index_cast %171 : i32 to index
    %c0_62 = arith.constant 0 : index
    %c0_63 = arith.constant 0 : index
    %174 = vector.load %arg4[%173, %c0_62, %c0_63] : memref<8x32x1xf32, #tpu.memory_space<vmem>>, vector<1x32x1xf32>
    %175 = vector.shape_cast %174 : vector<1x32x1xf32> to vector<32x1xf32>
    %176 = vector.broadcast %175 : vector<32x1xf32> to vector<32x512xf32>
    %177 = arith.addf %172, %176 : vector<32x512xf32>
    %cst_64 = arith.constant 0.000000e+00 : f32
    %178 = vector.broadcast %cst_64 : f32 to vector<32x512xf32>
    %179 = arith.maximumf %177, %178 : vector<32x512xf32>
    %cst_65 = arith.constant dense<0.000000e+00> : vector<4x512xf32>
    %180 = tpu.matmul %4, %179, %cst_65 {dimension_numbers = #tpu.dot_dimension_numbers<[1], [0], [0], [1], [0, 0, 1, 1], [], []>} : vector<4x32xf32>, vector<32x512xf32>, vector<4x512xf32> -> vector<4x512xf32>
    %181 = vector.broadcast %5 : vector<4x1xf32> to vector<4x512xf32>
    %182 = arith.addf %180, %181 : vector<4x512xf32>
    %c3_i32_66 = arith.constant 3 : i32
    %183 = arith.muli %171, %c3_i32_66 : i32
    %c0_i32_67 = arith.constant 0 : i32
    %184 = arith.addi %183, %c0_i32_67 : i32
    %185 = arith.index_cast %184 : i32 to index
    %186 = memref.load %arg2[%185] : memref<24xf32, #tpu.memory_space<smem>>
    %c1_i32_68 = arith.constant 1 : i32
    %187 = arith.addi %183, %c1_i32_68 : i32
    %188 = arith.index_cast %187 : i32 to index
    %189 = memref.load %arg2[%188] : memref<24xf32, #tpu.memory_space<smem>>
    %c2_i32_69 = arith.constant 2 : i32
    %190 = arith.addi %183, %c2_i32_69 : i32
    %191 = arith.index_cast %190 : i32 to index
    %192 = memref.load %arg2[%191] : memref<24xf32, #tpu.memory_space<smem>>
    %193 = vector.extract_strided_slice %8 {offsets = [20, 0], sizes = [4, 512], strides = [1, 1]} : vector<32x512xf32> to vector<4x512xf32>
    %194 = vector.broadcast %186 : f32 to vector<4x512xf32>
    %195 = arith.mulf %194, %169 : vector<4x512xf32>
    %196 = vector.broadcast %189 : f32 to vector<4x512xf32>
    %197 = arith.mulf %196, %182 : vector<4x512xf32>
    %198 = arith.subf %195, %197 : vector<4x512xf32>
    %199 = vector.broadcast %192 : f32 to vector<4x512xf32>
    %200 = arith.mulf %199, %193 : vector<4x512xf32>
    %201 = arith.addf %198, %200 : vector<4x512xf32>
    %c8_i32_70 = arith.constant 8 : i32
    %202 = arith.muli %arg1, %c8_i32_70 : i32
    %c6_i32 = arith.constant 6 : i32
    %203 = arith.addi %202, %c6_i32 : i32
    %cst_71 = arith.constant dense<0.000000e+00> : vector<32x512xf32>
    %204 = tpu.matmul %3, %201, %cst_71 {dimension_numbers = #tpu.dot_dimension_numbers<[1], [0], [0], [1], [0, 0, 1, 1], [], []>} : vector<32x4xf32>, vector<4x512xf32>, vector<32x512xf32> -> vector<32x512xf32>
    %205 = arith.index_cast %203 : i32 to index
    %c0_72 = arith.constant 0 : index
    %c0_73 = arith.constant 0 : index
    %206 = vector.load %arg4[%205, %c0_72, %c0_73] : memref<8x32x1xf32, #tpu.memory_space<vmem>>, vector<1x32x1xf32>
    %207 = vector.shape_cast %206 : vector<1x32x1xf32> to vector<32x1xf32>
    %208 = vector.broadcast %207 : vector<32x1xf32> to vector<32x512xf32>
    %209 = arith.addf %204, %208 : vector<32x512xf32>
    %cst_74 = arith.constant 0.000000e+00 : f32
    %210 = vector.broadcast %cst_74 : f32 to vector<32x512xf32>
    %211 = arith.maximumf %209, %210 : vector<32x512xf32>
    %cst_75 = arith.constant dense<0.000000e+00> : vector<4x512xf32>
    %212 = tpu.matmul %4, %211, %cst_75 {dimension_numbers = #tpu.dot_dimension_numbers<[1], [0], [0], [1], [0, 0, 1, 1], [], []>} : vector<4x32xf32>, vector<32x512xf32>, vector<4x512xf32> -> vector<4x512xf32>
    %213 = vector.broadcast %5 : vector<4x1xf32> to vector<4x512xf32>
    %214 = arith.addf %212, %213 : vector<4x512xf32>
    %c3_i32_76 = arith.constant 3 : i32
    %215 = arith.muli %203, %c3_i32_76 : i32
    %c0_i32_77 = arith.constant 0 : i32
    %216 = arith.addi %215, %c0_i32_77 : i32
    %217 = arith.index_cast %216 : i32 to index
    %218 = memref.load %arg2[%217] : memref<24xf32, #tpu.memory_space<smem>>
    %c1_i32_78 = arith.constant 1 : i32
    %219 = arith.addi %215, %c1_i32_78 : i32
    %220 = arith.index_cast %219 : i32 to index
    %221 = memref.load %arg2[%220] : memref<24xf32, #tpu.memory_space<smem>>
    %c2_i32_79 = arith.constant 2 : i32
    %222 = arith.addi %215, %c2_i32_79 : i32
    %223 = arith.index_cast %222 : i32 to index
    %224 = memref.load %arg2[%223] : memref<24xf32, #tpu.memory_space<smem>>
    %225 = vector.extract_strided_slice %8 {offsets = [24, 0], sizes = [4, 512], strides = [1, 1]} : vector<32x512xf32> to vector<4x512xf32>
    %226 = vector.broadcast %218 : f32 to vector<4x512xf32>
    %227 = arith.mulf %226, %201 : vector<4x512xf32>
    %228 = vector.broadcast %221 : f32 to vector<4x512xf32>
    %229 = arith.mulf %228, %214 : vector<4x512xf32>
    %230 = arith.subf %227, %229 : vector<4x512xf32>
    %231 = vector.broadcast %224 : f32 to vector<4x512xf32>
    %232 = arith.mulf %231, %225 : vector<4x512xf32>
    %233 = arith.addf %230, %232 : vector<4x512xf32>
    %c8_i32_80 = arith.constant 8 : i32
    %234 = arith.muli %arg1, %c8_i32_80 : i32
    %c7_i32 = arith.constant 7 : i32
    %235 = arith.addi %234, %c7_i32 : i32
    %cst_81 = arith.constant dense<0.000000e+00> : vector<32x512xf32>
    %236 = tpu.matmul %3, %233, %cst_81 {dimension_numbers = #tpu.dot_dimension_numbers<[1], [0], [0], [1], [0, 0, 1, 1], [], []>} : vector<32x4xf32>, vector<4x512xf32>, vector<32x512xf32> -> vector<32x512xf32>
    %237 = arith.index_cast %235 : i32 to index
    %c0_82 = arith.constant 0 : index
    %c0_83 = arith.constant 0 : index
    %238 = vector.load %arg4[%237, %c0_82, %c0_83] : memref<8x32x1xf32, #tpu.memory_space<vmem>>, vector<1x32x1xf32>
    %239 = vector.shape_cast %238 : vector<1x32x1xf32> to vector<32x1xf32>
    %240 = vector.broadcast %239 : vector<32x1xf32> to vector<32x512xf32>
    %241 = arith.addf %236, %240 : vector<32x512xf32>
    %cst_84 = arith.constant 0.000000e+00 : f32
    %242 = vector.broadcast %cst_84 : f32 to vector<32x512xf32>
    %243 = arith.maximumf %241, %242 : vector<32x512xf32>
    %cst_85 = arith.constant dense<0.000000e+00> : vector<4x512xf32>
    %244 = tpu.matmul %4, %243, %cst_85 {dimension_numbers = #tpu.dot_dimension_numbers<[1], [0], [0], [1], [0, 0, 1, 1], [], []>} : vector<4x32xf32>, vector<32x512xf32>, vector<4x512xf32> -> vector<4x512xf32>
    %245 = vector.broadcast %5 : vector<4x1xf32> to vector<4x512xf32>
    %246 = arith.addf %244, %245 : vector<4x512xf32>
    %c3_i32_86 = arith.constant 3 : i32
    %247 = arith.muli %235, %c3_i32_86 : i32
    %c0_i32_87 = arith.constant 0 : i32
    %248 = arith.addi %247, %c0_i32_87 : i32
    %249 = arith.index_cast %248 : i32 to index
    %250 = memref.load %arg2[%249] : memref<24xf32, #tpu.memory_space<smem>>
    %c1_i32_88 = arith.constant 1 : i32
    %251 = arith.addi %247, %c1_i32_88 : i32
    %252 = arith.index_cast %251 : i32 to index
    %253 = memref.load %arg2[%252] : memref<24xf32, #tpu.memory_space<smem>>
    %c2_i32_89 = arith.constant 2 : i32
    %254 = arith.addi %247, %c2_i32_89 : i32
    %255 = arith.index_cast %254 : i32 to index
    %256 = memref.load %arg2[%255] : memref<24xf32, #tpu.memory_space<smem>>
    %257 = vector.extract_strided_slice %8 {offsets = [28, 0], sizes = [4, 512], strides = [1, 1]} : vector<32x512xf32> to vector<4x512xf32>
    %258 = vector.broadcast %250 : f32 to vector<4x512xf32>
    %259 = arith.mulf %258, %233 : vector<4x512xf32>
    %260 = vector.broadcast %253 : f32 to vector<4x512xf32>
    %261 = arith.mulf %260, %246 : vector<4x512xf32>
    %262 = arith.subf %259, %261 : vector<4x512xf32>
    %263 = vector.broadcast %256 : f32 to vector<4x512xf32>
    %264 = arith.mulf %263, %257 : vector<4x512xf32>
    %265 = arith.addf %262, %264 : vector<4x512xf32>
    %c0_90 = arith.constant 0 : index
    %c0_91 = arith.constant 0 : index
    %266 = vector.load %arg9[%c0_90, %c0_91] : memref<4x512xf32, #tpu.memory_space<vmem>>, vector<4x512xf32>
    tpu.vector_store %arg9[%c0_90, %c0_91], %265 {strides = array<i32>} : memref<4x512xf32, #tpu.memory_space<vmem>>, vector<4x512xf32>,
    return
  }
  func.func @transform_0(%arg0: i32, %arg1: i32, %arg2: memref<24xf32, #tpu.memory_space<smem>>) -> (i32, i32) {
    %c0_i32 = arith.constant 0 : i32
    %c0_i32_0 = arith.constant 0 : i32
    return %c0_i32, %arg0 : i32, i32
  }
  func.func @transform_1(%arg0: i32, %arg1: i32, %arg2: memref<24xf32, #tpu.memory_space<smem>>) -> (i32, i32, i32) {
    %c0_i32 = arith.constant 0 : i32
    %c0_i32_0 = arith.constant 0 : i32
    %c0_i32_1 = arith.constant 0 : i32
    %c0_i32_2 = arith.constant 0 : i32
    return %c0_i32, %c0_i32_0, %c0_i32_1 : i32, i32, i32
  }
  func.func @transform_2(%arg0: i32, %arg1: i32, %arg2: memref<24xf32, #tpu.memory_space<smem>>) -> (i32, i32, i32) {
    %c0_i32 = arith.constant 0 : i32
    %c0_i32_0 = arith.constant 0 : i32
    return %arg1, %c0_i32, %arg0 : i32, i32, i32
  }
  func.func @transform_3(%arg0: i32, %arg1: i32, %arg2: memref<24xf32, #tpu.memory_space<smem>>) -> (i32, i32) {
    %c0_i32 = arith.constant 0 : i32
    %c0_i32_0 = arith.constant 0 : i32
    %c0_i32_1 = arith.constant 0 : i32
    return %c0_i32, %c0_i32_0 : i32, i32
  }
  func.func @transform_4(%arg0: i32, %arg1: i32, %arg2: memref<24xf32, #tpu.memory_space<smem>>) -> (i32, i32) {
    %c0_i32 = arith.constant 0 : i32
    %c0_i32_0 = arith.constant 0 : i32
    %c0_i32_1 = arith.constant 0 : i32
    return %c0_i32, %c0_i32_0 : i32, i32
  }
  func.func @transform_5(%arg0: i32, %arg1: i32, %arg2: memref<24xf32, #tpu.memory_space<smem>>) -> (i32, i32) {
    %c0_i32 = arith.constant 0 : i32
    %c0_i32_0 = arith.constant 0 : i32
    %c0_i32_1 = arith.constant 0 : i32
    return %c0_i32, %c0_i32_0 : i32, i32
  }
  func.func @transform_6(%arg0: i32, %arg1: i32, %arg2: memref<24xf32, #tpu.memory_space<smem>>) -> (i32, i32) {
    %c0_i32 = arith.constant 0 : i32
    %c0_i32_0 = arith.constant 0 : i32
    return %c0_i32, %arg0 : i32, i32
  }
}

</mosaic_0001>

<llo_original>
// kernel: tpu_custom_call.1
$region0: #{tpu_custom_call.1}
  #allocation0 [shape = 'u32[]', space=smem, size = 0x4, offset = 0x4, fixed_abs, tag = 'smem constant byte address 0x4 - core index']
  #allocation1 [shape = 'u32[72,128]{1,0:T(1,128)}', space=vmem, size = 0x9000, scoped, tag = 'internal scratch']
  #allocation2 [shape = 's32[1]{0}', space=sflag, size = 0x4, scoped, tag = 'scoped memory for tpu_custom_call.1']
  #allocation3 [shape = 'u8[512]{0}', space=smem, size = 0x200, scoped, tag = 'prefetched SMEM operand 0']
  %s0 = inlined_call_operand.vmem [shape: f32[24], index: 0, kind: input, shape index: {}]
  %s1 = inlined_call_operand.vmem [shape: f32[4,512], index: 1, kind: input, shape index: {}]
  %s2 = inlined_call_operand.vmem [shape: f32[8,32,1], index: 2, kind: input, shape index: {}]
  %s3 = inlined_call_operand.vmem [shape: bf16[1,32,512], index: 3, kind: input, shape index: {}]
  %s4 = inlined_call_operand.vmem [shape: f32[32,4], index: 4, kind: input, shape index: {}]
  %s5 = inlined_call_operand.vmem [shape: f32[4,32], index: 5, kind: input, shape index: {}]
  %s6 = inlined_call_operand.vmem [shape: f32[4,1], index: 6, kind: input, shape index: {}]
  %s7 = inlined_call_operand.hbm [shape: f32[4,512], index: 7, kind: output, shape index: {}]
  %s8 = sld [smem:[#allocation0]]
  $region38: #{tpu_custom_call.1} parent=0
    _
  %s10 = ssub.s32 1, %s8
  %s11 = scalar_select 0, %s10, %s8
  %s13 = sshll.u32 %s0, 4
  %s14 = int_to_ptr.vmem [resolvable:$true] %s13
  %16 = dma.vmem_to_smem %s14, 16, [#allocation3], [#allocation2]
  %18 = dma.done [#allocation2], 16
  %19 = sfence
  $region1: #{tpu_custom_call.1} parent=0
    #allocation4 [shape = 'u8[8192]{0}', space=vmem, size = 0x2000, scoped, tag = 'output window, operand 0, single buffered']
    #allocation5 [shape = 's32[1]{0}', space=sflag, size = 0x4, scoped, tag = 'scoped memory for tpu_custom_call.1']
    %20 = vsyncpa [#allocation5], 0
    // Predicated region
    $region2: #{tpu_custom_call.1} parent=1 // pred_check
      _
    $region3: #{tpu_custom_call.1} parent=1 // pred_check_branch
      %22 = sbr.rel (0) target = $region5
    $region4: #{tpu_custom_call.1} parent=1 // pred_region
      _
    $region5: #{tpu_custom_call.1} parent=1 // pred_fallthru
      _
    // Predicated region
    $region6: #{tpu_custom_call.1} parent=1 // pred_check
      _
    $region7: #{tpu_custom_call.1} parent=1 // pred_check_branch
      %24 = sbr.rel (0) target = $region9
    $region8: #{tpu_custom_call.1} parent=1 // pred_region
      _
    $region9: #{tpu_custom_call.1} parent=1 // pred_fallthru
      _
    // Predicated region
    $region10: #{tpu_custom_call.1} parent=1 // pred_check
      _
    $region11: #{tpu_custom_call.1} parent=1 // pred_check_branch
      %26 = sbr.rel (0) target = $region13
    $region12: #{tpu_custom_call.1} parent=1 // pred_region
      _
    $region13: #{tpu_custom_call.1} parent=1 // pred_fallthru
      _
    // Predicated region
    $region14: #{tpu_custom_call.1} parent=1 // pred_check
      _
    $region15: #{tpu_custom_call.1} parent=1 // pred_check_branch
      %28 = sbr.rel (0) target = $region17
    $region16: #{tpu_custom_call.1} parent=1 // pred_region
      _
    $region17: #{tpu_custom_call.1} parent=1 // pred_fallthru
      _
    // Predicated region
    $region18: #{tpu_custom_call.1} parent=1 // pred_check
      _
    $region19: #{tpu_custom_call.1} parent=1 // pred_check_branch
      %30 = sbr.rel (0) target = $region21
    $region20: #{tpu_custom_call.1} parent=1 // pred_region
      _
    $region21: #{tpu_custom_call.1} parent=1 // pred_fallthru
      _
    // Predicated region
    $region22: #{tpu_custom_call.1} parent=1 // pred_check
      _
    $region23: #{tpu_custom_call.1} parent=1 // pred_check_branch
      %32 = sbr.rel (0) target = $region25
    $region24: #{tpu_custom_call.1} parent=1 // pred_region
      _
    $region25: #{tpu_custom_call.1} parent=1 // pred_fallthru
      _
    %p33 = scmp.eq.s32.totalorder 0, 0
    // Predicated region
    $region26: #{tpu_custom_call.1} parent=1 // pred_check
      %p34 = pneg %p33
    $region27: #{tpu_custom_call.1} parent=1 // pred_check_branch
      %36 = sbr.rel (%p34) target = $region29
    $region28: #{tpu_custom_call.1} parent=1 // pred_region
      %v37 = vld [vmem:[%s1] sm:$0xff]
      %v38 = vld [vmem:[%s1 + $0x8] sm:$0xff]
      %39 = vst [vmem:[#allocation4] sm:$0xff] %v37
      %40 = vst [vmem:[#allocation4 + $0x8] sm:$0xff] %v38
    $region29: #{tpu_custom_call.1} parent=1 // pred_fallthru
      _
    %v41 = vld [vmem:[%s4] sm:$0xff]
    %v42 = vld [vmem:[%s4 + $0x8] sm:$0xff]
    %v43 = vld [vmem:[%s4 + $0x10] sm:$0xff]
    %v44 = vld [vmem:[%s4 + $0x18] sm:$0xff]
    %v45 = vld [vmem:[%s5] sm:$0xf]
    %v46 = vld [vmem:[%s6] sm:$0xf]
    %v47 = vld [vmem:[%s3] sm:$0xff]
    %v48 = vld [vmem:[%s3 + $0x8] sm:$0xff]
    %v49 = vld [vmem:[%s3 + $0x10] sm:$0xff]
    %v50 = vld [vmem:[%s3 + $0x18] sm:$0xff]
    %v51 = vld [vmem:[%s3 + $0x20] sm:$0xff]
    %v52 = vld [vmem:[%s3 + $0x28] sm:$0xff]
    %v53 = vld [vmem:[%s3 + $0x30] sm:$0xff]
    %v54 = vld [vmem:[%s3 + $0x38] sm:$0xff]
    %v55 = vunpack.c.l.bf16 %v47
    %v56 = vunpack.c.h.bf16 %v47
    %v57 = vunpack.c.l.bf16 %v48
    %v58 = vunpack.c.h.bf16 %v48
    %v59 = vunpack.c.l.bf16 %v49
    %v60 = vunpack.c.h.bf16 %v49
    %v61 = vunpack.c.l.bf16 %v50
    %v62 = vunpack.c.h.bf16 %v50
    %v63 = vunpack.c.l.bf16 %v51
    %v64 = vunpack.c.h.bf16 %v51
    %v65 = vunpack.c.l.bf16 %v52
    %v66 = vunpack.c.h.bf16 %v52
    %v67 = vunpack.c.l.bf16 %v53
    %v68 = vunpack.c.h.bf16 %v53
    %v69 = vunpack.c.l.bf16 %v54
    %v70 = vunpack.c.h.bf16 %v54
    %v71 = vld [vmem:[#allocation4] sm:$0xff]
    %v72 = vld [vmem:[#allocation4 + $0x8] sm:$0xff]
    %s73 = smul.u32 0, 8
    %s74 = smul.u32 %s73, 32
    %s75 = scalar_lea.vmem %s2, %s74
    %v76 = vld [vmem:[%s75] sm:$0xff]
    %v77 = vld [vmem:[%s75 + $0x8] sm:$0xff]
    %v78 = vld [vmem:[%s75 + $0x10] sm:$0xff]
    %v79 = vld [vmem:[%s75 + $0x18] sm:$0xff]
    %81 = vset.pattern.permute.xlu0 0
    %82 = vperm.xlu0 %81, %v76
    %v83 = vpop.permute.xlu0 %82
    %86 = vset.pattern.permute.xlu0 0
    %87 = vperm.xlu0 %86, %v77
    %v88 = vpop.permute.xlu0 %87
    %91 = vset.pattern.permute.xlu0 0
    %92 = vperm.xlu0 %91, %v78
    %v93 = vpop.permute.xlu0 %92
    %96 = vset.pattern.permute.xlu0 0
    %97 = vperm.xlu0 %96, %v79
    %v98 = vpop.permute.xlu0 %97
    %102 = vst [vmem:[#allocation1] ss:$2 sm:$0xff] %v71
    %s103 = scalar_lea.vmem [#allocation1], 16
    %104 = vst [vmem:[%s103] ss:$2 sm:$0xff] %v72
    %v105 = vld.sshfl [vmem:[#allocation1] sm:$0xff pattern:$0x75316420]
    %v106 = vld.sshfl [vmem:[#allocation1 + $0x8] sm:$0xff pattern:$0x75316420]
    %v107 = vld.sshfl [vmem:[#allocation1 + $0x10] sm:$0xff pattern:$0x75316420]
    %v108 = vld.sshfl [vmem:[#allocation1 + $0x18] sm:$0xff pattern:$0x75316420]
    %vm109 = vcmask 31744
    %v111 = vsel %vm109, %v41, 0
    %v114 = vsel %vm109, %v42, 0
    %v117 = vsel %vm109, %v43, 0
    %v120 = vsel %vm109, %v44, 0
    %vm122 = vcmask 1043456
    %v123 = vsel %vm122, %v105, 0
    %v125 = vsel %vm122, %v106, 0
    %v127 = vsel %vm122, %v107, 0
    %v129 = vsel %vm122, %v108, 0
    %131 = vmatpush.msra.mxu0 0.0
    %132 = vmatpush.msra.mxu0 0.0
    %133 = vmatpush.msra.mxu0 0.0
    %134 = vmatpush.msra.mxu0 0.0
    %135 = vmatpush.msra.mxu0 0.0
    %136 = vmatpush.msra.mxu0 0.0
    %137 = vmatpush.msra.mxu0 0.0
    %138 = vmatpush.msra.mxu0 0.0
    %139 = vmatpush.msra.mxu0 0.0
    %140 = vmatpush.msra.mxu0 0.0
    %141 = vmatpush.msra.mxu0 0.0
    %142 = vmatpush.msra.mxu0 0.0
    %143 = vmatpush.msra.mxu0 0.0
    %144 = vmatpush.msra.mxu0 0.0
    %145 = vmatpush.msra.mxu0 0.0
    %146 = vmatpush.msra.mxu0 %v123
    %147 = vmatmul.f32.gmra.mxu0 %v111
    %v148 = vpop.f32.mrf.mxu0
    %v149 = vadd.f32 %v83, %v148
    %150 = vmatmul.f32.gmra.mxu0 %v114
    %v151 = vpop.f32.mrf.mxu0
    %v152 = vadd.f32 %v88, %v151
    %153 = vmatmul.f32.gmra.mxu0 %v117
    %v154 = vpop.f32.mrf.mxu0
    %v155 = vadd.f32 %v93, %v154
    %156 = vmatmul.f32.gmra.mxu0 %v120
    %v157 = vpop.f32.mrf.mxu0
    %v158 = vadd.f32 %v98, %v157
    %159 = vdwg.mxu0
    %160 = vmatpush.msra.mxu0 0.0
    %161 = vmatpush.msra.mxu0 0.0
    %162 = vmatpush.msra.mxu0 0.0
    %163 = vmatpush.msra.mxu0 0.0
    %164 = vmatpush.msra.mxu0 0.0
    %165 = vmatpush.msra.mxu0 0.0
    %166 = vmatpush.msra.mxu0 0.0
    %167 = vmatpush.msra.mxu0 0.0
    %168 = vmatpush.msra.mxu0 0.0
    %169 = vmatpush.msra.mxu0 0.0
    %170 = vmatpush.msra.mxu0 0.0
    %171 = vmatpush.msra.mxu0 0.0
    %172 = vmatpush.msra.mxu0 0.0
    %173 = vmatpush.msra.mxu0 0.0
    %174 = vmatpush.msra.mxu0 0.0
    %175 = vmatpush.msra.mxu0 %v125
    %176 = vmatmul.f32.gmra.mxu0 %v111
    %v177 = vpop.f32.mrf.mxu0
    %v178 = vadd.f32 %v83, %v177
    %179 = vmatmul.f32.gmra.mxu0 %v114
    %v180 = vpop.f32.mrf.mxu0
    %v181 = vadd.f32 %v88, %v180
    %182 = vmatmul.f32.gmra.mxu0 %v117
    %v183 = vpop.f32.mrf.mxu0
    %v184 = vadd.f32 %v93, %v183
    %185 = vmatmul.f32.gmra.mxu0 %v120
    %v186 = vpop.f32.mrf.mxu0
    %v187 = vadd.f32 %v98, %v186
    %188 = vdwg.mxu0
    %189 = vmatpush.msra.mxu0 0.0
    %190 = vmatpush.msra.mxu0 0.0
    %191 = vmatpush.msra.mxu0 0.0
    %192 = vmatpush.msra.mxu0 0.0
    %193 = vmatpush.msra.mxu0 0.0
    %194 = vmatpush.msra.mxu0 0.0
    %195 = vmatpush.msra.mxu0 0.0
    %196 = vmatpush.msra.mxu0 0.0
    %197 = vmatpush.msra.mxu0 0.0
    %198 = vmatpush.msra.mxu0 0.0
    %199 = vmatpush.msra.mxu0 0.0
    %200 = vmatpush.msra.mxu0 0.0
    %201 = vmatpush.msra.mxu0 0.0
    %202 = vmatpush.msra.mxu0 0.0
    %203 = vmatpush.msra.mxu0 0.0
    %204 = vmatpush.msra.mxu0 %v127
    %205 = vmatmul.f32.gmra.mxu0 %v111
    %v206 = vpop.f32.mrf.mxu0
    %v207 = vadd.f32 %v83, %v206
    %208 = vmatmul.f32.gmra.mxu0 %v114
    %v209 = vpop.f32.mrf.mxu0
    %v210 = vadd.f32 %v88, %v209
    %211 = vmatmul.f32.gmra.mxu0 %v117
    %v212 = vpop.f32.mrf.mxu0
    %v213 = vadd.f32 %v93, %v212
    %214 = vmatmul.f32.gmra.mxu0 %v120
    %v215 = vpop.f32.mrf.mxu0
    %v216 = vadd.f32 %v98, %v215
    %217 = vdwg.mxu0
    %218 = vmatpush.msra.mxu0 0.0
    %219 = vmatpush.msra.mxu0 0.0
    %220 = vmatpush.msra.mxu0 0.0
    %221 = vmatpush.msra.mxu0 0.0
    %222 = vmatpush.msra.mxu0 0.0
    %223 = vmatpush.msra.mxu0 0.0
    %224 = vmatpush.msra.mxu0 0.0
    %225 = vmatpush.msra.mxu0 0.0
    %226 = vmatpush.msra.mxu0 0.0
    %227 = vmatpush.msra.mxu0 0.0
    %228 = vmatpush.msra.mxu0 0.0
    %229 = vmatpush.msra.mxu0 0.0
    %230 = vmatpush.msra.mxu0 0.0
    %231 = vmatpush.msra.mxu0 0.0
    %232 = vmatpush.msra.mxu0 0.0
    %233 = vmatpush.msra.mxu0 %v129
    %234 = vmatmul.f32.gmra.mxu0 %v111
    %v235 = vpop.f32.mrf.mxu0
    %v236 = vadd.f32 %v83, %v235
    %237 = vmatmul.f32.gmra.mxu0 %v114
    %v238 = vpop.f32.mrf.mxu0
    %v239 = vadd.f32 %v88, %v238
    %240 = vmatmul.f32.gmra.mxu0 %v117
    %v241 = vpop.f32.mrf.mxu0
    %v242 = vadd.f32 %v93, %v241
    %243 = vmatmul.f32.gmra.mxu0 %v120
    %v244 = vpop.f32.mrf.mxu0
    %v245 = vadd.f32 %v98, %v244
    %246 = vdwg.mxu0
    %v247 = vmax.f32 %v149, 0.0
    %v248 = vmax.f32 %v178, 0.0
    %v249 = vmax.f32 %v207, 0.0
    %v250 = vmax.f32 %v236, 0.0
    %v251 = vmax.f32 %v152, 0.0
    %v252 = vmax.f32 %v181, 0.0
    %v253 = vmax.f32 %v210, 0.0
    %v254 = vmax.f32 %v239, 0.0
    %v255 = vmax.f32 %v155, 0.0
    %v256 = vmax.f32 %v184, 0.0
    %v257 = vmax.f32 %v213, 0.0
    %v258 = vmax.f32 %v242, 0.0
    %v259 = vmax.f32 %v158, 0.0
    %v260 = vmax.f32 %v187, 0.0
    %v261 = vmax.f32 %v216, 0.0
    %v262 = vmax.f32 %v245, 0.0
    %264 = vset.pattern.permute.xlu0 0
    %265 = vperm.xlu0 %264, %v46
    %v266 = vpop.permute.xlu0 %265
    %vm268 = vcmask 261120
    %v270 = vsel %vm268, %v45, 0
    %272 = vmatpush.msra.mxu0 0.0
    %273 = vmatpush.msra.mxu0 0.0
    %274 = vmatpush.msra.mxu0 0.0
    %275 = vmatpush.msra.mxu0 0.0
    %276 = vmatpush.msra.mxu0 0.0
    %277 = vmatpush.msra.mxu0 0.0
    %278 = vmatpush.msra.mxu0 0.0
    %279 = vmatpush.msra.mxu0 0.0
    %280 = vmatpush.msra.mxu0 0.0
    %281 = vmatpush.msra.mxu0 0.0
    %282 = vmatpush.msra.mxu0 0.0
    %283 = vmatpush.msra.mxu0 0.0
    %284 = vmatpush.msra.mxu0 %v259
    %285 = vmatpush.msra.mxu0 %v255
    %286 = vmatpush.msra.mxu0 %v251
    %287 = vmatpush.msra.mxu0 %v247
    %288 = vmatmul.f32.gmra.mxu0 %v270
    %v289 = vpop.f32.mrf.mxu0
    %v290 = vadd.f32 %v266, %v289
    %291 = vdwg.mxu0
    %292 = vmatpush.msra.mxu0 0.0
    %293 = vmatpush.msra.mxu0 0.0
    %294 = vmatpush.msra.mxu0 0.0
    %295 = vmatpush.msra.mxu0 0.0
    %296 = vmatpush.msra.mxu0 0.0
    %297 = vmatpush.msra.mxu0 0.0
    %298 = vmatpush.msra.mxu0 0.0
    %299 = vmatpush.msra.mxu0 0.0
    %300 = vmatpush.msra.mxu0 0.0
    %301 = vmatpush.msra.mxu0 0.0
    %302 = vmatpush.msra.mxu0 0.0
    %303 = vmatpush.msra.mxu0 0.0
    %304 = vmatpush.msra.mxu0 %v260
    %305 = vmatpush.msra.mxu0 %v256
    %306 = vmatpush.msra.mxu0 %v252
    %307 = vmatpush.msra.mxu0 %v248
    %308 = vmatmul.f32.gmra.mxu0 %v270
    %v309 = vpop.f32.mrf.mxu0
    %v310 = vadd.f32 %v266, %v309
    %311 = vdwg.mxu0
    %312 = vmatpush.msra.mxu0 0.0
    %313 = vmatpush.msra.mxu0 0.0
    %314 = vmatpush.msra.mxu0 0.0
    %315 = vmatpush.msra.mxu0 0.0
    %316 = vmatpush.msra.mxu0 0.0
    %317 = vmatpush.msra.mxu0 0.0
    %318 = vmatpush.msra.mxu0 0.0
    %319 = vmatpush.msra.mxu0 0.0
    %320 = vmatpush.msra.mxu0 0.0
    %321 = vmatpush.msra.mxu0 0.0
    %322 = vmatpush.msra.mxu0 0.0
    %323 = vmatpush.msra.mxu0 0.0
    %324 = vmatpush.msra.mxu0 %v261
    %325 = vmatpush.msra.mxu0 %v257
    %326 = vmatpush.msra.mxu0 %v253
    %327 = vmatpush.msra.mxu0 %v249
    %328 = vmatmul.f32.gmra.mxu0 %v270
    %v329 = vpop.f32.mrf.mxu0
    %v330 = vadd.f32 %v266, %v329
    %331 = vdwg.mxu0
    %332 = vmatpush.msra.mxu0 0.0
    %333 = vmatpush.msra.mxu0 0.0
    %334 = vmatpush.msra.mxu0 0.0
    %335 = vmatpush.msra.mxu0 0.0
    %336 = vmatpush.msra.mxu0 0.0
    %337 = vmatpush.msra.mxu0 0.0
    %338 = vmatpush.msra.mxu0 0.0
    %339 = vmatpush.msra.mxu0 0.0
    %340 = vmatpush.msra.mxu0 0.0
    %341 = vmatpush.msra.mxu0 0.0
    %342 = vmatpush.msra.mxu0 0.0
    %343 = vmatpush.msra.mxu0 0.0
    %344 = vmatpush.msra.mxu0 %v262
    %345 = vmatpush.msra.mxu0 %v258
    %346 = vmatpush.msra.mxu0 %v254
    %347 = vmatpush.msra.mxu0 %v250
    %348 = vmatmul.f32.gmra.mxu0 %v270
    %v349 = vpop.f32.mrf.mxu0
    %v350 = vadd.f32 %v266, %v349
    %351 = vdwg.mxu0
    %s352 = smul.u32 0, 24
    %s353 = sld [smem:[#allocation3 + %s352]]
    %s354 = sadd.s32 %s352, 1
    %s355 = sld [smem:[#allocation3 + %s354]]
    %s356 = sadd.s32 %s352, 2
    %s357 = sld [smem:[#allocation3 + %s356]]
    %v358 = vstv %s353
    %v359 = vmul.f32 %v358, %v71
    %v360 = vmul.f32 %v358, %v72
    %v361 = vstv %s355
    %v362 = vmul.f32 %v361, %v290
    %v363 = vmul.f32 %v361, %v310
    %v364 = vmul.f32 %v361, %v330
    %v365 = vmul.f32 %v361, %v350
    %v370 = vrot.slane %v363, 4
    %v371 = vrot.slane %v365, 4
    %v372 = vsel %vm122, %v362, %v370
    %v373 = vsel %vm122, %v364, %v371
    %v376 = vsub.f32 %v359, %v372
    %v377 = vsub.f32 %v360, %v373
    %v378 = vstv %s357
    %v379 = vmul.f32 %v378, %v55
    %v380 = vmul.f32 %v378, %v56
    %v381 = vmul.f32 %v378, %v57
    %v382 = vmul.f32 %v378, %v58
    %v387 = vrot.slane %v380, 4
    %v388 = vrot.slane %v382, 4
    %v389 = vsel %vm122, %v379, %v387
    %v390 = vsel %vm122, %v381, %v388
    %v393 = vadd.f32 %v376, %v389
    %v394 = vadd.f32 %v377, %v390
    %s395 = sadd.s32 %s73, 1
    %s396 = smul.u32 %s395, 32
    %s397 = scalar_lea.vmem %s2, %s396
    %v398 = vld [vmem:[%s397] sm:$0xff]
    %v399 = vld [vmem:[%s397 + $0x8] sm:$0xff]
    %v400 = vld [vmem:[%s397 + $0x10] sm:$0xff]
    %v401 = vld [vmem:[%s397 + $0x18] sm:$0xff]
    %403 = vset.pattern.permute.xlu0 0
    %404 = vperm.xlu0 %403, %v398
    %v405 = vpop.permute.xlu0 %404
    %408 = vset.pattern.permute.xlu0 0
    %409 = vperm.xlu0 %408, %v399
    %v410 = vpop.permute.xlu0 %409
    %413 = vset.pattern.permute.xlu0 0
    %414 = vperm.xlu0 %413, %v400
    %v415 = vpop.permute.xlu0 %414
    %418 = vset.pattern.permute.xlu0 0
    %419 = vperm.xlu0 %418, %v401
    %v420 = vpop.permute.xlu0 %419
    %424 = vst [vmem:[#allocation1] ss:$2 sm:$0xff] %v393
    %s425 = scalar_lea.vmem [#allocation1], 16
    %426 = vst [vmem:[%s425] ss:$2 sm:$0xff] %v394
    %v427 = vld.sshfl [vmem:[#allocation1] sm:$0xff pattern:$0x75316420]
    %v428 = vld.sshfl [vmem:[#allocation1 + $0x8] sm:$0xff pattern:$0x75316420]
    %v429 = vld.sshfl [vmem:[#allocation1 + $0x10] sm:$0xff pattern:$0x75316420]
    %v430 = vld.sshfl [vmem:[#allocation1 + $0x18] sm:$0xff pattern:$0x75316420]
    %v431 = vsel %vm122, %v427, 0
    %v433 = vsel %vm122, %v428, 0
    %v435 = vsel %vm122, %v429, 0
    %v437 = vsel %vm122, %v430, 0
    %439 = vmatpush.msra.mxu0 0.0
    %440 = vmatpush.msra.mxu0 0.0
    %441 = vmatpush.msra.mxu0 0.0
    %442 = vmatpush.msra.mxu0 0.0
    %443 = vmatpush.msra.mxu0 0.0
    %444 = vmatpush.msra.mxu0 0.0
    %445 = vmatpush.msra.mxu0 0.0
    %446 = vmatpush.msra.mxu0 0.0
    %447 = vmatpush.msra.mxu0 0.0
    %448 = vmatpush.msra.mxu0 0.0
    %449 = vmatpush.msra.mxu0 0.0
    %450 = vmatpush.msra.mxu0 0.0
    %451 = vmatpush.msra.mxu0 0.0
    %452 = vmatpush.msra.mxu0 0.0
    %453 = vmatpush.msra.mxu0 0.0
    %454 = vmatpush.msra.mxu0 %v431
    %455 = vmatmul.f32.gmra.mxu0 %v111
    %v456 = vpop.f32.mrf.mxu0
    %v457 = vadd.f32 %v405, %v456
    %458 = vmatmul.f32.gmra.mxu0 %v114
    %v459 = vpop.f32.mrf.mxu0
    %v460 = vadd.f32 %v410, %v459
    %461 = vmatmul.f32.gmra.mxu0 %v117
    %v462 = vpop.f32.mrf.mxu0
    %v463 = vadd.f32 %v415, %v462
    %464 = vmatmul.f32.gmra.mxu0 %v120
    %v465 = vpop.f32.mrf.mxu0
    %v466 = vadd.f32 %v420, %v465
    %467 = vdwg.mxu0
    %468 = vmatpush.msra.mxu0 0.0
    %469 = vmatpush.msra.mxu0 0.0
    %470 = vmatpush.msra.mxu0 0.0
    %471 = vmatpush.msra.mxu0 0.0
    %472 = vmatpush.msra.mxu0 0.0
    %473 = vmatpush.msra.mxu0 0.0
    %474 = vmatpush.msra.mxu0 0.0
    %475 = vmatpush.msra.mxu0 0.0
    %476 = vmatpush.msra.mxu0 0.0
    %477 = vmatpush.msra.mxu0 0.0
    %478 = vmatpush.msra.mxu0 0.0
    %479 = vmatpush.msra.mxu0 0.0
    %480 = vmatpush.msra.mxu0 0.0
    %481 = vmatpush.msra.mxu0 0.0
    %482 = vmatpush.msra.mxu0 0.0
    %483 = vmatpush.msra.mxu0 %v433
    %484 = vmatmul.f32.gmra.mxu0 %v111
    %v485 = vpop.f32.mrf.mxu0
    %v486 = vadd.f32 %v405, %v485
    %487 = vmatmul.f32.gmra.mxu0 %v114
    %v488 = vpop.f32.mrf.mxu0
    %v489 = vadd.f32 %v410, %v488
    %490 = vmatmul.f32.gmra.mxu0 %v117
    %v491 = vpop.f32.mrf.mxu0
    %v492 = vadd.f32 %v415, %v491
    %493 = vmatmul.f32.gmra.mxu0 %v120
    %v494 = vpop.f32.mrf.mxu0
    %v495 = vadd.f32 %v420, %v494
    %496 = vdwg.mxu0
    %497 = vmatpush.msra.mxu0 0.0
    %498 = vmatpush.msra.mxu0 0.0
    %499 = vmatpush.msra.mxu0 0.0
    %500 = vmatpush.msra.mxu0 0.0
    %501 = vmatpush.msra.mxu0 0.0
    %502 = vmatpush.msra.mxu0 0.0
    %503 = vmatpush.msra.mxu0 0.0
    %504 = vmatpush.msra.mxu0 0.0
    %505 = vmatpush.msra.mxu0 0.0
    %506 = vmatpush.msra.mxu0 0.0
    %507 = vmatpush.msra.mxu0 0.0
    %508 = vmatpush.msra.mxu0 0.0
    %509 = vmatpush.msra.mxu0 0.0
    %510 = vmatpush.msra.mxu0 0.0
    %511 = vmatpush.msra.mxu0 0.0
    %512 = vmatpush.msra.mxu0 %v435
    %513 = vmatmul.f32.gmra.mxu0 %v111
    %v514 = vpop.f32.mrf.mxu0
    %v515 = vadd.f32 %v405, %v514
    %516 = vmatmul.f32.gmra.mxu0 %v114
    %v517 = vpop.f32.mrf.mxu0
    %v518 = vadd.f32 %v410, %v517
    %519 = vmatmul.f32.gmra.mxu0 %v117
    %v520 = vpop.f32.mrf.mxu0
    %v521 = vadd.f32 %v415, %v520
    %522 = vmatmul.f32.gmra.mxu0 %v120
    %v523 = vpop.f32.mrf.mxu0
    %v524 = vadd.f32 %v420, %v523
    %525 = vdwg.mxu0
    %526 = vmatpush.msra.mxu0 0.0
    %527 = vmatpush.msra.mxu0 0.0
    %528 = vmatpush.msra.mxu0 0.0
    %529 = vmatpush.msra.mxu0 0.0
    %530 = vmatpush.msra.mxu0 0.0
    %531 = vmatpush.msra.mxu0 0.0
    %532 = vmatpush.msra.mxu0 0.0
    %533 = vmatpush.msra.mxu0 0.0
    %534 = vmatpush.msra.mxu0 0.0
    %535 = vmatpush.msra.mxu0 0.0
    %536 = vmatpush.msra.mxu0 0.0
    %537 = vmatpush.msra.mxu0 0.0
    %538 = vmatpush.msra.mxu0 0.0
    %539 = vmatpush.msra.mxu0 0.0
    %540 = vmatpush.msra.mxu0 0.0
    %541 = vmatpush.msra.mxu0 %v437
    %542 = vmatmul.f32.gmra.mxu0 %v111
    %v543 = vpop.f32.mrf.mxu0
    %v544 = vadd.f32 %v405, %v543
    %545 = vmatmul.f32.gmra.mxu0 %v114
    %v546 = vpop.f32.mrf.mxu0
    %v547 = vadd.f32 %v410, %v546
    %548 = vmatmul.f32.gmra.mxu0 %v117
    %v549 = vpop.f32.mrf.mxu0
    %v550 = vadd.f32 %v415, %v549
    %551 = vmatmul.f32.gmra.mxu0 %v120
    %v552 = vpop.f32.mrf.mxu0
    %v553 = vadd.f32 %v420, %v552
    %554 = vdwg.mxu0
    %v555 = vmax.f32 %v457, 0.0
    %v556 = vmax.f32 %v486, 0.0
    %v557 = vmax.f32 %v515, 0.0
    %v558 = vmax.f32 %v544, 0.0
    %v559 = vmax.f32 %v460, 0.0
    %v560 = vmax.f32 %v489, 0.0
    %v561 = vmax.f32 %v518, 0.0
    %v562 = vmax.f32 %v547, 0.0
    %v563 = vmax.f32 %v463, 0.0
    %v564 = vmax.f32 %v492, 0.0
    %v565 = vmax.f32 %v521, 0.0
    %v566 = vmax.f32 %v550, 0.0
    %v567 = vmax.f32 %v466, 0.0
    %v568 = vmax.f32 %v495, 0.0
    %v569 = vmax.f32 %v524, 0.0
    %v570 = vmax.f32 %v553, 0.0
    %571 = vmatpush.msra.mxu0 0.0
    %572 = vmatpush.msra.mxu0 0.0
    %573 = vmatpush.msra.mxu0 0.0
    %574 = vmatpush.msra.mxu0 0.0
    %575 = vmatpush.msra.mxu0 0.0
    %576 = vmatpush.msra.mxu0 0.0
    %577 = vmatpush.msra.mxu0 0.0
    %578 = vmatpush.msra.mxu0 0.0
    %579 = vmatpush.msra.mxu0 0.0
    %580 = vmatpush.msra.mxu0 0.0
    %581 = vmatpush.msra.mxu0 0.0
    %582 = vmatpush.msra.mxu0 0.0
    %583 = vmatpush.msra.mxu0 %v567
    %584 = vmatpush.msra.mxu0 %v563
    %585 = vmatpush.msra.mxu0 %v559
    %586 = vmatpush.msra.mxu0 %v555
    %587 = vmatmul.f32.gmra.mxu0 %v270
    %v588 = vpop.f32.mrf.mxu0
    %v589 = vadd.f32 %v266, %v588
    %590 = vdwg.mxu0
    %591 = vmatpush.msra.mxu0 0.0
    %592 = vmatpush.msra.mxu0 0.0
    %593 = vmatpush.msra.mxu0 0.0
    %594 = vmatpush.msra.mxu0 0.0
    %595 = vmatpush.msra.mxu0 0.0
    %596 = vmatpush.msra.mxu0 0.0
    %597 = vmatpush.msra.mxu0 0.0
    %598 = vmatpush.msra.mxu0 0.0
    %599 = vmatpush.msra.mxu0 0.0
    %600 = vmatpush.msra.mxu0 0.0
    %601 = vmatpush.msra.mxu0 0.0
    %602 = vmatpush.msra.mxu0 0.0
    %603 = vmatpush.msra.mxu0 %v568
    %604 = vmatpush.msra.mxu0 %v564
    %605 = vmatpush.msra.mxu0 %v560
    %606 = vmatpush.msra.mxu0 %v556
    %607 = vmatmul.f32.gmra.mxu0 %v270
    %v608 = vpop.f32.mrf.mxu0
    %v609 = vadd.f32 %v266, %v608
    %610 = vdwg.mxu0
    %611 = vmatpush.msra.mxu0 0.0
    %612 = vmatpush.msra.mxu0 0.0
    %613 = vmatpush.msra.mxu0 0.0
    %614 = vmatpush.msra.mxu0 0.0
    %615 = vmatpush.msra.mxu0 0.0
    %616 = vmatpush.msra.mxu0 0.0
    %617 = vmatpush.msra.mxu0 0.0
    %618 = vmatpush.msra.mxu0 0.0
    %619 = vmatpush.msra.mxu0 0.0
    %620 = vmatpush.msra.mxu0 0.0
    %621 = vmatpush.msra.mxu0 0.0
    %622 = vmatpush.msra.mxu0 0.0
    %623 = vmatpush.msra.mxu0 %v569
    %624 = vmatpush.msra.mxu0 %v565
    %625 = vmatpush.msra.mxu0 %v561
    %626 = vmatpush.msra.mxu0 %v557
    %627 = vmatmul.f32.gmra.mxu0 %v270
    %v628 = vpop.f32.mrf.mxu0
    %v629 = vadd.f32 %v266, %v628
    %630 = vdwg.mxu0
    %631 = vmatpush.msra.mxu0 0.0
    %632 = vmatpush.msra.mxu0 0.0
    %633 = vmatpush.msra.mxu0 0.0
    %634 = vmatpush.msra.mxu0 0.0
    %635 = vmatpush.msra.mxu0 0.0
    %636 = vmatpush.msra.mxu0 0.0
    %637 = vmatpush.msra.mxu0 0.0
    %638 = vmatpush.msra.mxu0 0.0
    %639 = vmatpush.msra.mxu0 0.0
    %640 = vmatpush.msra.mxu0 0.0
    %641 = vmatpush.msra.mxu0 0.0
    %642 = vmatpush.msra.mxu0 0.0
    %643 = vmatpush.msra.mxu0 %v570
    %644 = vmatpush.msra.mxu0 %v566
    %645 = vmatpush.msra.mxu0 %v562
    %646 = vmatpush.msra.mxu0 %v558
    %647 = vmatmul.f32.gmra.mxu0 %v270
    %v648 = vpop.f32.mrf.mxu0
    %v649 = vadd.f32 %v266, %v648
    %650 = vdwg.mxu0
    %s651 = smul.u32 %s395, 3
    %s652 = sld [smem:[#allocation3 + %s651]]
    %s653 = sadd.s32 %s651, 1
    %s654 = sld [smem:[#allocation3 + %s653]]
    %s655 = sadd.s32 %s651, 2
    %s656 = sld [smem:[#allocation3 + %s655]]
    %v657 = vstv %s652
    %v658 = vmul.f32 %v657, %v393
    %v659 = vmul.f32 %v657, %v394
    %v660 = vstv %s654
    %v661 = vmul.f32 %v660, %v589
    %v662 = vmul.f32 %v660, %v609
    %v663 = vmul.f32 %v660, %v629
    %v664 = vmul.f32 %v660, %v649
    %v669 = vrot.slane %v662, 4
    %v670 = vrot.slane %v664, 4
    %v671 = vsel %vm122, %v661, %v669
    %v672 = vsel %vm122, %v663, %v670
    %v675 = vsub.f32 %v658, %v671
    %v676 = vsub.f32 %v659, %v672
    %v677 = vstv %s656
    %v678 = vmul.f32 %v677, %v55
    %v679 = vmul.f32 %v677, %v56
    %v680 = vmul.f32 %v677, %v57
    %v681 = vmul.f32 %v677, %v58
    %686 = vst.sshfl [vmem:[#allocation1] sm:$0xff pattern:$0x75316420] %v678
    %687 = vst.sshfl [vmem:[#allocation1 + $0x8] sm:$0xff pattern:$0x75316420] %v679
    %688 = vst.sshfl [vmem:[#allocation1 + $0x10] sm:$0xff pattern:$0x75316420] %v680
    %689 = vst.sshfl [vmem:[#allocation1 + $0x18] sm:$0xff pattern:$0x75316420] %v681
    %s690 = scalar_lea.vmem [#allocation1], 1
    %v691 = vld [vmem:[%s690] ss:$2 sm:$0xff]
    %s692 = scalar_lea.vmem [#allocation1], 17
    %v693 = vld [vmem:[%s692] ss:$2 sm:$0xff]
    %v696 = vadd.f32 %v675, %v691
    %v697 = vadd.f32 %v676, %v693
    %s698 = sadd.s32 %s73, 2
    %s699 = smul.u32 %s698, 32
    %s700 = scalar_lea.vmem %s2, %s699
    %v701 = vld [vmem:[%s700] sm:$0xff]
    %v702 = vld [vmem:[%s700 + $0x8] sm:$0xff]
    %v703 = vld [vmem:[%s700 + $0x10] sm:$0xff]
    %v704 = vld [vmem:[%s700 + $0x18] sm:$0xff]
    %706 = vset.pattern.permute.xlu0 0
    %707 = vperm.xlu0 %706, %v701
    %v708 = vpop.permute.xlu0 %707
    %711 = vset.pattern.permute.xlu0 0
    %712 = vperm.xlu0 %711, %v702
    %v713 = vpop.permute.xlu0 %712
    %716 = vset.pattern.permute.xlu0 0
    %717 = vperm.xlu0 %716, %v703
    %v718 = vpop.permute.xlu0 %717
    %721 = vset.pattern.permute.xlu0 0
    %722 = vperm.xlu0 %721, %v704
    %v723 = vpop.permute.xlu0 %722
    %727 = vst [vmem:[#allocation1] ss:$2 sm:$0xff] %v696
    %s728 = scalar_lea.vmem [#allocation1], 16
    %729 = vst [vmem:[%s728] ss:$2 sm:$0xff] %v697
    %v730 = vld.sshfl [vmem:[#allocation1] sm:$0xff pattern:$0x75316420]
    %v731 = vld.sshfl [vmem:[#allocation1 + $0x8] sm:$0xff pattern:$0x75316420]
    %v732 = vld.sshfl [vmem:[#allocation1 + $0x10] sm:$0xff pattern:$0x75316420]
    %v733 = vld.sshfl [vmem:[#allocation1 + $0x18] sm:$0xff pattern:$0x75316420]
    %v734 = vsel %vm122, %v730, 0
    %v736 = vsel %vm122, %v731, 0
    %v738 = vsel %vm122, %v732, 0
    %v740 = vsel %vm122, %v733, 0
    %742 = vmatpush.msra.mxu0 0.0
    %743 = vmatpush.msra.mxu0 0.0
    %744 = vmatpush.msra.mxu0 0.0
    %745 = vmatpush.msra.mxu0 0.0
    %746 = vmatpush.msra.mxu0 0.0
    %747 = vmatpush.msra.mxu0 0.0
    %748 = vmatpush.msra.mxu0 0.0
    %749 = vmatpush.msra.mxu0 0.0
    %750 = vmatpush.msra.mxu0 0.0
    %751 = vmatpush.msra.mxu0 0.0
    %752 = vmatpush.msra.mxu0 0.0
    %753 = vmatpush.msra.mxu0 0.0
    %754 = vmatpush.msra.mxu0 0.0
    %755 = vmatpush.msra.mxu0 0.0
    %756 = vmatpush.msra.mxu0 0.0
    %757 = vmatpush.msra.mxu0 %v734
    %758 = vmatmul.f32.gmra.mxu0 %v111
    %v759 = vpop.f32.mrf.mxu0
    %v760 = vadd.f32 %v708, %v759
    %761 = vmatmul.f32.gmra.mxu0 %v114
    %v762 = vpop.f32.mrf.mxu0
    %v763 = vadd.f32 %v713, %v762
    %764 = vmatmul.f32.gmra.mxu0 %v117
    %v765 = vpop.f32.mrf.mxu0
    %v766 = vadd.f32 %v718, %v765
    %767 = vmatmul.f32.gmra.mxu0 %v120
    %v768 = vpop.f32.mrf.mxu0
    %v769 = vadd.f32 %v723, %v768
    %770 = vdwg.mxu0
    %771 = vmatpush.msra.mxu0 0.0
    %772 = vmatpush.msra.mxu0 0.0
    %773 = vmatpush.msra.mxu0 0.0
    %774 = vmatpush.msra.mxu0 0.0
    %775 = vmatpush.msra.mxu0 0.0
    %776 = vmatpush.msra.mxu0 0.0
    %777 = vmatpush.msra.mxu0 0.0
    %778 = vmatpush.msra.mxu0 0.0
    %779 = vmatpush.msra.mxu0 0.0
    %780 = vmatpush.msra.mxu0 0.0
    %781 = vmatpush.msra.mxu0 0.0
    %782 = vmatpush.msra.mxu0 0.0
    %783 = vmatpush.msra.mxu0 0.0
    %784 = vmatpush.msra.mxu0 0.0
    %785 = vmatpush.msra.mxu0 0.0
    %786 = vmatpush.msra.mxu0 %v736
    %787 = vmatmul.f32.gmra.mxu0 %v111
    %v788 = vpop.f32.mrf.mxu0
    %v789 = vadd.f32 %v708, %v788
    %790 = vmatmul.f32.gmra.mxu0 %v114
    %v791 = vpop.f32.mrf.mxu0
    %v792 = vadd.f32 %v713, %v791
    %793 = vmatmul.f32.gmra.mxu0 %v117
    %v794 = vpop.f32.mrf.mxu0
    %v795 = vadd.f32 %v718, %v794
    %796 = vmatmul.f32.gmra.mxu0 %v120
    %v797 = vpop.f32.mrf.mxu0
    %v798 = vadd.f32 %v723, %v797
    %799 = vdwg.mxu0
    %800 = vmatpush.msra.mxu0 0.0
    %801 = vmatpush.msra.mxu0 0.0
    %802 = vmatpush.msra.mxu0 0.0
    %803 = vmatpush.msra.mxu0 0.0
    %804 = vmatpush.msra.mxu0 0.0
    %805 = vmatpush.msra.mxu0 0.0
    %806 = vmatpush.msra.mxu0 0.0
    %807 = vmatpush.msra.mxu0 0.0
    %808 = vmatpush.msra.mxu0 0.0
    %809 = vmatpush.msra.mxu0 0.0
    %810 = vmatpush.msra.mxu0 0.0
    %811 = vmatpush.msra.mxu0 0.0
    %812 = vmatpush.msra.mxu0 0.0
    %813 = vmatpush.msra.mxu0 0.0
    %814 = vmatpush.msra.mxu0 0.0
    %815 = vmatpush.msra.mxu0 %v738
    %816 = vmatmul.f32.gmra.mxu0 %v111
    %v817 = vpop.f32.mrf.mxu0
    %v818 = vadd.f32 %v708, %v817
    %819 = vmatmul.f32.gmra.mxu0 %v114
    %v820 = vpop.f32.mrf.mxu0
    %v821 = vadd.f32 %v713, %v820
    %822 = vmatmul.f32.gmra.mxu0 %v117
    %v823 = vpop.f32.mrf.mxu0
    %v824 = vadd.f32 %v718, %v823
    %825 = vmatmul.f32.gmra.mxu0 %v120
    %v826 = vpop.f32.mrf.mxu0
    %v827 = vadd.f32 %v723, %v826
    %828 = vdwg.mxu0
    %829 = vmatpush.msra.mxu0 0.0
    %830 = vmatpush.msra.mxu0 0.0
    %831 = vmatpush.msra.mxu0 0.0
    %832 = vmatpush.msra.mxu0 0.0
    %833 = vmatpush.msra.mxu0 0.0
    %834 = vmatpush.msra.mxu0 0.0
    %835 = vmatpush.msra.mxu0 0.0
    %836 = vmatpush.msra.mxu0 0.0
    %837 = vmatpush.msra.mxu0 0.0
    %838 = vmatpush.msra.mxu0 0.0
    %839 = vmatpush.msra.mxu0 0.0
    %840 = vmatpush.msra.mxu0 0.0
    %841 = vmatpush.msra.mxu0 0.0
    %842 = vmatpush.msra.mxu0 0.0
    %843 = vmatpush.msra.mxu0 0.0
    %844 = vmatpush.msra.mxu0 %v740
    %845 = vmatmul.f32.gmra.mxu0 %v111
    %v846 = vpop.f32.mrf.mxu0
    %v847 = vadd.f32 %v708, %v846
    %848 = vmatmul.f32.gmra.mxu0 %v114
    %v849 = vpop.f32.mrf.mxu0
    %v850 = vadd.f32 %v713, %v849
    %851 = vmatmul.f32.gmra.mxu0 %v117
    %v852 = vpop.f32.mrf.mxu0
    %v853 = vadd.f32 %v718, %v852
    %854 = vmatmul.f32.gmra.mxu0 %v120
    %v855 = vpop.f32.mrf.mxu0
    %v856 = vadd.f32 %v723, %v855
    %857 = vdwg.mxu0
    %v858 = vmax.f32 %v760, 0.0
    %v859 = vmax.f32 %v789, 0.0
    %v860 = vmax.f32 %v818, 0.0
    %v861 = vmax.f32 %v847, 0.0
    %v862 = vmax.f32 %v763, 0.0
    %v863 = vmax.f32 %v792, 0.0
    %v864 = vmax.f32 %v821, 0.0
    %v865 = vmax.f32 %v850, 0.0
    %v866 = vmax.f32 %v766, 0.0
    %v867 = vmax.f32 %v795, 0.0
    %v868 = vmax.f32 %v824, 0.0
    %v869 = vmax.f32 %v853, 0.0
    %v870 = vmax.f32 %v769, 0.0
    %v871 = vmax.f32 %v798, 0.0
    %v872 = vmax.f32 %v827, 0.0
    %v873 = vmax.f32 %v856, 0.0
    %874 = vmatpush.msra.mxu0 0.0
    %875 = vmatpush.msra.mxu0 0.0
    %876 = vmatpush.msra.mxu0 0.0
    %877 = vmatpush.msra.mxu0 0.0
    %878 = vmatpush.msra.mxu0 0.0
    %879 = vmatpush.msra.mxu0 0.0
    %880 = vmatpush.msra.mxu0 0.0
    %881 = vmatpush.msra.mxu0 0.0
    %882 = vmatpush.msra.mxu0 0.0
    %883 = vmatpush.msra.mxu0 0.0
    %884 = vmatpush.msra.mxu0 0.0
    %885 = vmatpush.msra.mxu0 0.0
    %886 = vmatpush.msra.mxu0 %v870
    %887 = vmatpush.msra.mxu0 %v866
    %888 = vmatpush.msra.mxu0 %v862
    %889 = vmatpush.msra.mxu0 %v858
    %890 = vmatmul.f32.gmra.mxu0 %v270
    %v891 = vpop.f32.mrf.mxu0
    %v892 = vadd.f32 %v266, %v891
    %893 = vdwg.mxu0
    %894 = vmatpush.msra.mxu0 0.0
    %895 = vmatpush.msra.mxu0 0.0
    %896 = vmatpush.msra.mxu0 0.0
    %897 = vmatpush.msra.mxu0 0.0
    %898 = vmatpush.msra.mxu0 0.0
    %899 = vmatpush.msra.mxu0 0.0
    %900 = vmatpush.msra.mxu0 0.0
    %901 = vmatpush.msra.mxu0 0.0
    %902 = vmatpush.msra.mxu0 0.0
    %903 = vmatpush.msra.mxu0 0.0
    %904 = vmatpush.msra.mxu0 0.0
    %905 = vmatpush.msra.mxu0 0.0
    %906 = vmatpush.msra.mxu0 %v871
    %907 = vmatpush.msra.mxu0 %v867
    %908 = vmatpush.msra.mxu0 %v863
    %909 = vmatpush.msra.mxu0 %v859
    %910 = vmatmul.f32.gmra.mxu0 %v270
    %v911 = vpop.f32.mrf.mxu0
    %v912 = vadd.f32 %v266, %v911
    %913 = vdwg.mxu0
    %914 = vmatpush.msra.mxu0 0.0
    %915 = vmatpush.msra.mxu0 0.0
    %916 = vmatpush.msra.mxu0 0.0
    %917 = vmatpush.msra.mxu0 0.0
    %918 = vmatpush.msra.mxu0 0.0
    %919 = vmatpush.msra.mxu0 0.0
    %920 = vmatpush.msra.mxu0 0.0
    %921 = vmatpush.msra.mxu0 0.0
    %922 = vmatpush.msra.mxu0 0.0
    %923 = vmatpush.msra.mxu0 0.0
    %924 = vmatpush.msra.mxu0 0.0
    %925 = vmatpush.msra.mxu0 0.0
    %926 = vmatpush.msra.mxu0 %v872
    %927 = vmatpush.msra.mxu0 %v868
    %928 = vmatpush.msra.mxu0 %v864
    %929 = vmatpush.msra.mxu0 %v860
    %930 = vmatmul.f32.gmra.mxu0 %v270
    %v931 = vpop.f32.mrf.mxu0
    %v932 = vadd.f32 %v266, %v931
    %933 = vdwg.mxu0
    %934 = vmatpush.msra.mxu0 0.0
    %935 = vmatpush.msra.mxu0 0.0
    %936 = vmatpush.msra.mxu0 0.0
    %937 = vmatpush.msra.mxu0 0.0
    %938 = vmatpush.msra.mxu0 0.0
    %939 = vmatpush.msra.mxu0 0.0
    %940 = vmatpush.msra.mxu0 0.0
    %941 = vmatpush.msra.mxu0 0.0
    %942 = vmatpush.msra.mxu0 0.0
    %943 = vmatpush.msra.mxu0 0.0
    %944 = vmatpush.msra.mxu0 0.0
    %945 = vmatpush.msra.mxu0 0.0
    %946 = vmatpush.msra.mxu0 %v873
    %947 = vmatpush.msra.mxu0 %v869
    %948 = vmatpush.msra.mxu0 %v865
    %949 = vmatpush.msra.mxu0 %v861
    %950 = vmatmul.f32.gmra.mxu0 %v270
    %v951 = vpop.f32.mrf.mxu0
    %v952 = vadd.f32 %v266, %v951
    %953 = vdwg.mxu0
    %s954 = smul.u32 %s698, 3
    %s955 = sld [smem:[#allocation3 + %s954]]
    %s956 = sadd.s32 %s954, 1
    %s957 = sld [smem:[#allocation3 + %s956]]
    %s958 = sadd.s32 %s954, 2
    %s959 = sld [smem:[#allocation3 + %s958]]
    %v960 = vstv %s955
    %v961 = vmul.f32 %v960, %v696
    %v962 = vmul.f32 %v960, %v697
    %v963 = vstv %s957
    %v964 = vmul.f32 %v963, %v892
    %v965 = vmul.f32 %v963, %v912
    %v966 = vmul.f32 %v963, %v932
    %v967 = vmul.f32 %v963, %v952
    %v972 = vrot.slane %v965, 4
    %v973 = vrot.slane %v967, 4
    %v974 = vsel %vm122, %v964, %v972
    %v975 = vsel %vm122, %v966, %v973
    %v978 = vsub.f32 %v961, %v974
    %v979 = vsub.f32 %v962, %v975
    %v980 = vstv %s959
    %v981 = vmul.f32 %v980, %v59
    %v982 = vmul.f32 %v980, %v60
    %v983 = vmul.f32 %v980, %v61
    %v984 = vmul.f32 %v980, %v62
    %v989 = vrot.slane %v982, 4
    %v990 = vrot.slane %v984, 4
    %v991 = vsel %vm122, %v981, %v989
    %v992 = vsel %vm122, %v983, %v990
    %v995 = vadd.f32 %v978, %v991
    %v996 = vadd.f32 %v979, %v992
    %s997 = sadd.s32 %s73, 3
    %s998 = smul.u32 %s997, 32
    %s999 = scalar_lea.vmem %s2, %s998
    %v1000 = vld [vmem:[%s999] sm:$0xff]
    %v1001 = vld [vmem:[%s999 + $0x8] sm:$0xff]
    %v1002 = vld [vmem:[%s999 + $0x10] sm:$0xff]
    %v1003 = vld [vmem:[%s999 + $0x18] sm:$0xff]
    %1005 = vset.pattern.permute.xlu0 0
    %1006 = vperm.xlu0 %1005, %v1000
    %v1007 = vpop.permute.xlu0 %1006
    %1010 = vset.pattern.permute.xlu0 0
    %1011 = vperm.xlu0 %1010, %v1001
    %v1012 = vpop.permute.xlu0 %1011
    %1015 = vset.pattern.permute.xlu0 0
    %1016 = vperm.xlu0 %1015, %v1002
    %v1017 = vpop.permute.xlu0 %1016
    %1020 = vset.pattern.permute.xlu0 0
    %1021 = vperm.xlu0 %1020, %v1003
    %v1022 = vpop.permute.xlu0 %1021
    %1026 = vst [vmem:[#allocation1] ss:$2 sm:$0xff] %v995
    %s1027 = scalar_lea.vmem [#allocation1], 16
    %1028 = vst [vmem:[%s1027] ss:$2 sm:$0xff] %v996
    %v1029 = vld.sshfl [vmem:[#allocation1] sm:$0xff pattern:$0x75316420]
    %v1030 = vld.sshfl [vmem:[#allocation1 + $0x8] sm:$0xff pattern:$0x75316420]
    %v1031 = vld.sshfl [vmem:[#allocation1 + $0x10] sm:$0xff pattern:$0x75316420]
    %v1032 = vld.sshfl [vmem:[#allocation1 + $0x18] sm:$0xff pattern:$0x75316420]
    %v1033 = vsel %vm122, %v1029, 0
    %v1035 = vsel %vm122, %v1030, 0
    %v1037 = vsel %vm122, %v1031, 0
    %v1039 = vsel %vm122, %v1032, 0
    %1041 = vmatpush.msra.mxu0 0.0
    %1042 = vmatpush.msra.mxu0 0.0
    %1043 = vmatpush.msra.mxu0 0.0
    %1044 = vmatpush.msra.mxu0 0.0
    %1045 = vmatpush.msra.mxu0 0.0
    %1046 = vmatpush.msra.mxu0 0.0
    %1047 = vmatpush.msra.mxu0 0.0
    %1048 = vmatpush.msra.mxu0 0.0
    %1049 = vmatpush.msra.mxu0 0.0
    %1050 = vmatpush.msra.mxu0 0.0
    %1051 = vmatpush.msra.mxu0 0.0
    %1052 = vmatpush.msra.mxu0 0.0
    %1053 = vmatpush.msra.mxu0 0.0
    %1054 = vmatpush.msra.mxu0 0.0
    %1055 = vmatpush.msra.mxu0 0.0
    %1056 = vmatpush.msra.mxu0 %v1033
    %1057 = vmatmul.f32.gmra.mxu0 %v111
    %v1058 = vpop.f32.mrf.mxu0
    %v1059 = vadd.f32 %v1007, %v1058
    %1060 = vmatmul.f32.gmra.mxu0 %v114
    %v1061 = vpop.f32.mrf.mxu0
    %v1062 = vadd.f32 %v1012, %v1061
    %1063 = vmatmul.f32.gmra.mxu0 %v117
    %v1064 = vpop.f32.mrf.mxu0
    %v1065 = vadd.f32 %v1017, %v1064
    %1066 = vmatmul.f32.gmra.mxu0 %v120
    %v1067 = vpop.f32.mrf.mxu0
    %v1068 = vadd.f32 %v1022, %v1067
    %1069 = vdwg.mxu0
    %1070 = vmatpush.msra.mxu0 0.0
    %1071 = vmatpush.msra.mxu0 0.0
    %1072 = vmatpush.msra.mxu0 0.0
    %1073 = vmatpush.msra.mxu0 0.0
    %1074 = vmatpush.msra.mxu0 0.0
    %1075 = vmatpush.msra.mxu0 0.0
    %1076 = vmatpush.msra.mxu0 0.0
    %1077 = vmatpush.msra.mxu0 0.0
    %1078 = vmatpush.msra.mxu0 0.0
    %1079 = vmatpush.msra.mxu0 0.0
    %1080 = vmatpush.msra.mxu0 0.0
    %1081 = vmatpush.msra.mxu0 0.0
    %1082 = vmatpush.msra.mxu0 0.0
    %1083 = vmatpush.msra.mxu0 0.0
    %1084 = vmatpush.msra.mxu0 0.0
    %1085 = vmatpush.msra.mxu0 %v1035
    %1086 = vmatmul.f32.gmra.mxu0 %v111
    %v1087 = vpop.f32.mrf.mxu0
    %v1088 = vadd.f32 %v1007, %v1087
    %1089 = vmatmul.f32.gmra.mxu0 %v114
    %v1090 = vpop.f32.mrf.mxu0
    %v1091 = vadd.f32 %v1012, %v1090
    %1092 = vmatmul.f32.gmra.mxu0 %v117
    %v1093 = vpop.f32.mrf.mxu0
    %v1094 = vadd.f32 %v1017, %v1093
    %1095 = vmatmul.f32.gmra.mxu0 %v120
    %v1096 = vpop.f32.mrf.mxu0
    %v1097 = vadd.f32 %v1022, %v1096
    %1098 = vdwg.mxu0
    %1099 = vmatpush.msra.mxu0 0.0
    %1100 = vmatpush.msra.mxu0 0.0
    %1101 = vmatpush.msra.mxu0 0.0
    %1102 = vmatpush.msra.mxu0 0.0
    %1103 = vmatpush.msra.mxu0 0.0
    %1104 = vmatpush.msra.mxu0 0.0
    %1105 = vmatpush.msra.mxu0 0.0
    %1106 = vmatpush.msra.mxu0 0.0
    %1107 = vmatpush.msra.mxu0 0.0
    %1108 = vmatpush.msra.mxu0 0.0
    %1109 = vmatpush.msra.mxu0 0.0
    %1110 = vmatpush.msra.mxu0 0.0
    %1111 = vmatpush.msra.mxu0 0.0
    %1112 = vmatpush.msra.mxu0 0.0
    %1113 = vmatpush.msra.mxu0 0.0
    %1114 = vmatpush.msra.mxu0 %v1037
    %1115 = vmatmul.f32.gmra.mxu0 %v111
    %v1116 = vpop.f32.mrf.mxu0
    %v1117 = vadd.f32 %v1007, %v1116
    %1118 = vmatmul.f32.gmra.mxu0 %v114
    %v1119 = vpop.f32.mrf.mxu0
    %v1120 = vadd.f32 %v1012, %v1119
    %1121 = vmatmul.f32.gmra.mxu0 %v117
    %v1122 = vpop.f32.mrf.mxu0
    %v1123 = vadd.f32 %v1017, %v1122
    %1124 = vmatmul.f32.gmra.mxu0 %v120
    %v1125 = vpop.f32.mrf.mxu0
    %v1126 = vadd.f32 %v1022, %v1125
    %1127 = vdwg.mxu0
    %1128 = vmatpush.msra.mxu0 0.0
    %1129 = vmatpush.msra.mxu0 0.0
    %1130 = vmatpush.msra.mxu0 0.0
    %1131 = vmatpush.msra.mxu0 0.0
    %1132 = vmatpush.msra.mxu0 0.0
    %1133 = vmatpush.msra.mxu0 0.0
    %1134 = vmatpush.msra.mxu0 0.0
    %1135 = vmatpush.msra.mxu0 0.0
    %1136 = vmatpush.msra.mxu0 0.0
    %1137 = vmatpush.msra.mxu0 0.0
    %1138 = vmatpush.msra.mxu0 0.0
    %1139 = vmatpush.msra.mxu0 0.0
    %1140 = vmatpush.msra.mxu0 0.0
    %1141 = vmatpush.msra.mxu0 0.0
    %1142 = vmatpush.msra.mxu0 0.0
    %1143 = vmatpush.msra.mxu0 %v1039
    %1144 = vmatmul.f32.gmra.mxu0 %v111
    %v1145 = vpop.f32.mrf.mxu0
    %v1146 = vadd.f32 %v1007, %v1145
    %1147 = vmatmul.f32.gmra.mxu0 %v114
    %v1148 = vpop.f32.mrf.mxu0
    %v1149 = vadd.f32 %v1012, %v1148
    %1150 = vmatmul.f32.gmra.mxu0 %v117
    %v1151 = vpop.f32.mrf.mxu0
    %v1152 = vadd.f32 %v1017, %v1151
    %1153 = vmatmul.f32.gmra.mxu0 %v120
    %v1154 = vpop.f32.mrf.mxu0
    %v1155 = vadd.f32 %v1022, %v1154
    %1156 = vdwg.mxu0
    %v1157 = vmax.f32 %v1059, 0.0
    %v1158 = vmax.f32 %v1088, 0.0
    %v1159 = vmax.f32 %v1117, 0.0
    %v1160 = vmax.f32 %v1146, 0.0
    %v1161 = vmax.f32 %v1062, 0.0
    %v1162 = vmax.f32 %v1091, 0.0
    %v1163 = vmax.f32 %v1120, 0.0
    %v1164 = vmax.f32 %v1149, 0.0
    %v1165 = vmax.f32 %v1065, 0.0
    %v1166 = vmax.f32 %v1094, 0.0
    %v1167 = vmax.f32 %v1123, 0.0
    %v1168 = vmax.f32 %v1152, 0.0
    %v1169 = vmax.f32 %v1068, 0.0
    %v1170 = vmax.f32 %v1097, 0.0
    %v1171 = vmax.f32 %v1126, 0.0
    %v1172 = vmax.f32 %v1155, 0.0
    %1173 = vmatpush.msra.mxu0 0.0
    %1174 = vmatpush.msra.mxu0 0.0
    %1175 = vmatpush.msra.mxu0 0.0
    %1176 = vmatpush.msra.mxu0 0.0
    %1177 = vmatpush.msra.mxu0 0.0
    %1178 = vmatpush.msra.mxu0 0.0
    %1179 = vmatpush.msra.mxu0 0.0
    %1180 = vmatpush.msra.mxu0 0.0
    %1181 = vmatpush.msra.mxu0 0.0
    %1182 = vmatpush.msra.mxu0 0.0
    %1183 = vmatpush.msra.mxu0 0.0
    %1184 = vmatpush.msra.mxu0 0.0
    %1185 = vmatpush.msra.mxu0 %v1169
    %1186 = vmatpush.msra.mxu0 %v1165
    %1187 = vmatpush.msra.mxu0 %v1161
    %1188 = vmatpush.msra.mxu0 %v1157
    %1189 = vmatmul.f32.gmra.mxu0 %v270
    %v1190 = vpop.f32.mrf.mxu0
    %v1191 = vadd.f32 %v266, %v1190
    %1192 = vdwg.mxu0
    %1193 = vmatpush.msra.mxu0 0.0
    %1194 = vmatpush.msra.mxu0 0.0
    %1195 = vmatpush.msra.mxu0 0.0
    %1196 = vmatpush.msra.mxu0 0.0
    %1197 = vmatpush.msra.mxu0 0.0
    %1198 = vmatpush.msra.mxu0 0.0
    %1199 = vmatpush.msra.mxu0 0.0
    %1200 = vmatpush.msra.mxu0 0.0
    %1201 = vmatpush.msra.mxu0 0.0
    %1202 = vmatpush.msra.mxu0 0.0
    %1203 = vmatpush.msra.mxu0 0.0
    %1204 = vmatpush.msra.mxu0 0.0
    %1205 = vmatpush.msra.mxu0 %v1170
    %1206 = vmatpush.msra.mxu0 %v1166
    %1207 = vmatpush.msra.mxu0 %v1162
    %1208 = vmatpush.msra.mxu0 %v1158
    %1209 = vmatmul.f32.gmra.mxu0 %v270
    %v1210 = vpop.f32.mrf.mxu0
    %v1211 = vadd.f32 %v266, %v1210
    %1212 = vdwg.mxu0
    %1213 = vmatpush.msra.mxu0 0.0
    %1214 = vmatpush.msra.mxu0 0.0
    %1215 = vmatpush.msra.mxu0 0.0
    %1216 = vmatpush.msra.mxu0 0.0
    %1217 = vmatpush.msra.mxu0 0.0
    %1218 = vmatpush.msra.mxu0 0.0
    %1219 = vmatpush.msra.mxu0 0.0
    %1220 = vmatpush.msra.mxu0 0.0
    %1221 = vmatpush.msra.mxu0 0.0
    %1222 = vmatpush.msra.mxu0 0.0
    %1223 = vmatpush.msra.mxu0 0.0
    %1224 = vmatpush.msra.mxu0 0.0
    %1225 = vmatpush.msra.mxu0 %v1171
    %1226 = vmatpush.msra.mxu0 %v1167
    %1227 = vmatpush.msra.mxu0 %v1163
    %1228 = vmatpush.msra.mxu0 %v1159
    %1229 = vmatmul.f32.gmra.mxu0 %v270
    %v1230 = vpop.f32.mrf.mxu0
    %v1231 = vadd.f32 %v266, %v1230
    %1232 = vdwg.mxu0
    %1233 = vmatpush.msra.mxu0 0.0
    %1234 = vmatpush.msra.mxu0 0.0
    %1235 = vmatpush.msra.mxu0 0.0
    %1236 = vmatpush.msra.mxu0 0.0
    %1237 = vmatpush.msra.mxu0 0.0
    %1238 = vmatpush.msra.mxu0 0.0
    %1239 = vmatpush.msra.mxu0 0.0
    %1240 = vmatpush.msra.mxu0 0.0
    %1241 = vmatpush.msra.mxu0 0.0
    %1242 = vmatpush.msra.mxu0 0.0
    %1243 = vmatpush.msra.mxu0 0.0
    %1244 = vmatpush.msra.mxu0 0.0
    %1245 = vmatpush.msra.mxu0 %v1172
    %1246 = vmatpush.msra.mxu0 %v1168
    %1247 = vmatpush.msra.mxu0 %v1164
    %1248 = vmatpush.msra.mxu0 %v1160
    %1249 = vmatmul.f32.gmra.mxu0 %v270
    %v1250 = vpop.f32.mrf.mxu0
    %v1251 = vadd.f32 %v266, %v1250
    %1252 = vdwg.mxu0
    %s1253 = smul.u32 %s997, 3
    %s1254 = sld [smem:[#allocation3 + %s1253]]
    %s1255 = sadd.s32 %s1253, 1
    %s1256 = sld [smem:[#allocation3 + %s1255]]
    %s1257 = sadd.s32 %s1253, 2
    %s1258 = sld [smem:[#allocation3 + %s1257]]
    %v1259 = vstv %s1254
    %v1260 = vmul.f32 %v1259, %v995
    %v1261 = vmul.f32 %v1259, %v996
    %v1262 = vstv %s1256
    %v1263 = vmul.f32 %v1262, %v1191
    %v1264 = vmul.f32 %v1262, %v1211
    %v1265 = vmul.f32 %v1262, %v1231
    %v1266 = vmul.f32 %v1262, %v1251
    %v1271 = vrot.slane %v1264, 4
    %v1272 = vrot.slane %v1266, 4
    %v1273 = vsel %vm122, %v1263, %v1271
    %v1274 = vsel %vm122, %v1265, %v1272
    %v1277 = vsub.f32 %v1260, %v1273
    %v1278 = vsub.f32 %v1261, %v1274
    %v1279 = vstv %s1258
    %v1280 = vmul.f32 %v1279, %v59
    %v1281 = vmul.f32 %v1279, %v60
    %v1282 = vmul.f32 %v1279, %v61
    %v1283 = vmul.f32 %v1279, %v62
    %1288 = vst.sshfl [vmem:[#allocation1] sm:$0xff pattern:$0x75316420] %v1280
    %1289 = vst.sshfl [vmem:[#allocation1 + $0x8] sm:$0xff pattern:$0x75316420] %v1281
    %1290 = vst.sshfl [vmem:[#allocation1 + $0x10] sm:$0xff pattern:$0x75316420] %v1282
    %1291 = vst.sshfl [vmem:[#allocation1 + $0x18] sm:$0xff pattern:$0x75316420] %v1283
    %s1292 = scalar_lea.vmem [#allocation1], 1
    %v1293 = vld [vmem:[%s1292] ss:$2 sm:$0xff]
    %s1294 = scalar_lea.vmem [#allocation1], 17
    %v1295 = vld [vmem:[%s1294] ss:$2 sm:$0xff]
    %v1298 = vadd.f32 %v1277, %v1293
    %v1299 = vadd.f32 %v1278, %v1295
    %s1300 = sadd.s32 %s73, 4
    %s1301 = smul.u32 %s1300, 32
    %s1302 = scalar_lea.vmem %s2, %s1301
    %v1303 = vld [vmem:[%s1302] sm:$0xff]
    %v1304 = vld [vmem:[%s1302 + $0x8] sm:$0xff]
    %v1305 = vld [vmem:[%s1302 + $0x10] sm:$0xff]
    %v1306 = vld [vmem:[%s1302 + $0x18] sm:$0xff]
    %1308 = vset.pattern.permute.xlu0 0
    %1309 = vperm.xlu0 %1308, %v1303
    %v1310 = vpop.permute.xlu0 %1309
    %1313 = vset.pattern.permute.xlu0 0
    %1314 = vperm.xlu0 %1313, %v1304
    %v1315 = vpop.permute.xlu0 %1314
    %1318 = vset.pattern.permute.xlu0 0
    %1319 = vperm.xlu0 %1318, %v1305
    %v1320 = vpop.permute.xlu0 %1319
    %1323 = vset.pattern.permute.xlu0 0
    %1324 = vperm.xlu0 %1323, %v1306
    %v1325 = vpop.permute.xlu0 %1324
    %1329 = vst [vmem:[#allocation1] ss:$2 sm:$0xff] %v1298
    %s1330 = scalar_lea.vmem [#allocation1], 16
    %1331 = vst [vmem:[%s1330] ss:$2 sm:$0xff] %v1299
    %v1332 = vld.sshfl [vmem:[#allocation1] sm:$0xff pattern:$0x75316420]
    %v1333 = vld.sshfl [vmem:[#allocation1 + $0x8] sm:$0xff pattern:$0x75316420]
    %v1334 = vld.sshfl [vmem:[#allocation1 + $0x10] sm:$0xff pattern:$0x75316420]
    %v1335 = vld.sshfl [vmem:[#allocation1 + $0x18] sm:$0xff pattern:$0x75316420]
    %v1336 = vsel %vm122, %v1332, 0
    %v1338 = vsel %vm122, %v1333, 0
    %v1340 = vsel %vm122, %v1334, 0
    %v1342 = vsel %vm122, %v1335, 0
    %1344 = vmatpush.msra.mxu0 0.0
    %1345 = vmatpush.msra.mxu0 0.0
    %1346 = vmatpush.msra.mxu0 0.0
    %1347 = vmatpush.msra.mxu0 0.0
    %1348 = vmatpush.msra.mxu0 0.0
    %1349 = vmatpush.msra.mxu0 0.0
    %1350 = vmatpush.msra.mxu0 0.0
    %1351 = vmatpush.msra.mxu0 0.0
    %1352 = vmatpush.msra.mxu0 0.0
    %1353 = vmatpush.msra.mxu0 0.0
    %1354 = vmatpush.msra.mxu0 0.0
    %1355 = vmatpush.msra.mxu0 0.0
    %1356 = vmatpush.msra.mxu0 0.0
    %1357 = vmatpush.msra.mxu0 0.0
    %1358 = vmatpush.msra.mxu0 0.0
    %1359 = vmatpush.msra.mxu0 %v1336
    %1360 = vmatmul.f32.gmra.mxu0 %v111
    %v1361 = vpop.f32.mrf.mxu0
    %v1362 = vadd.f32 %v1310, %v1361
    %1363 = vmatmul.f32.gmra.mxu0 %v114
    %v1364 = vpop.f32.mrf.mxu0
    %v1365 = vadd.f32 %v1315, %v1364
    %1366 = vmatmul.f32.gmra.mxu0 %v117
    %v1367 = vpop.f32.mrf.mxu0
    %v1368 = vadd.f32 %v1320, %v1367
    %1369 = vmatmul.f32.gmra.mxu0 %v120
    %v1370 = vpop.f32.mrf.mxu0
    %v1371 = vadd.f32 %v1325, %v1370
    %1372 = vdwg.mxu0
    %1373 = vmatpush.msra.mxu0 0.0
    %1374 = vmatpush.msra.mxu0 0.0
    %1375 = vmatpush.msra.mxu0 0.0
    %1376 = vmatpush.msra.mxu0 0.0
    %1377 = vmatpush.msra.mxu0 0.0
    %1378 = vmatpush.msra.mxu0 0.0
    %1379 = vmatpush.msra.mxu0 0.0
    %1380 = vmatpush.msra.mxu0 0.0
    %1381 = vmatpush.msra.mxu0 0.0
    %1382 = vmatpush.msra.mxu0 0.0
    %1383 = vmatpush.msra.mxu0 0.0
    %1384 = vmatpush.msra.mxu0 0.0
    %1385 = vmatpush.msra.mxu0 0.0
    %1386 = vmatpush.msra.mxu0 0.0
    %1387 = vmatpush.msra.mxu0 0.0
    %1388 = vmatpush.msra.mxu0 %v1338
    %1389 = vmatmul.f32.gmra.mxu0 %v111
    %v1390 = vpop.f32.mrf.mxu0
    %v1391 = vadd.f32 %v1310, %v1390
    %1392 = vmatmul.f32.gmra.mxu0 %v114
    %v1393 = vpop.f32.mrf.mxu0
    %v1394 = vadd.f32 %v1315, %v1393
    %1395 = vmatmul.f32.gmra.mxu0 %v117
    %v1396 = vpop.f32.mrf.mxu0
    %v1397 = vadd.f32 %v1320, %v1396
    %1398 = vmatmul.f32.gmra.mxu0 %v120
    %v1399 = vpop.f32.mrf.mxu0
    %v1400 = vadd.f32 %v1325, %v1399
    %1401 = vdwg.mxu0
    %1402 = vmatpush.msra.mxu0 0.0
    %1403 = vmatpush.msra.mxu0 0.0
    %1404 = vmatpush.msra.mxu0 0.0
    %1405 = vmatpush.msra.mxu0 0.0
    %1406 = vmatpush.msra.mxu0 0.0
    %1407 = vmatpush.msra.mxu0 0.0
    %1408 = vmatpush.msra.mxu0 0.0
    %1409 = vmatpush.msra.mxu0 0.0
    %1410 = vmatpush.msra.mxu0 0.0
    %1411 = vmatpush.msra.mxu0 0.0
    %1412 = vmatpush.msra.mxu0 0.0
    %1413 = vmatpush.msra.mxu0 0.0
    %1414 = vmatpush.msra.mxu0 0.0
    %1415 = vmatpush.msra.mxu0 0.0
    %1416 = vmatpush.msra.mxu0 0.0
    %1417 = vmatpush.msra.mxu0 %v1340
    %1418 = vmatmul.f32.gmra.mxu0 %v111
    %v1419 = vpop.f32.mrf.mxu0
    %v1420 = vadd.f32 %v1310, %v1419
    %1421 = vmatmul.f32.gmra.mxu0 %v114
    %v1422 = vpop.f32.mrf.mxu0
    %v1423 = vadd.f32 %v1315, %v1422
    %1424 = vmatmul.f32.gmra.mxu0 %v117
    %v1425 = vpop.f32.mrf.mxu0
    %v1426 = vadd.f32 %v1320, %v1425
    %1427 = vmatmul.f32.gmra.mxu0 %v120
    %v1428 = vpop.f32.mrf.mxu0
    %v1429 = vadd.f32 %v1325, %v1428
    %1430 = vdwg.mxu0
    %1431 = vmatpush.msra.mxu0 0.0
    %1432 = vmatpush.msra.mxu0 0.0
    %1433 = vmatpush.msra.mxu0 0.0
    %1434 = vmatpush.msra.mxu0 0.0
    %1435 = vmatpush.msra.mxu0 0.0
    %1436 = vmatpush.msra.mxu0 0.0
    %1437 = vmatpush.msra.mxu0 0.0
    %1438 = vmatpush.msra.mxu0 0.0
    %1439 = vmatpush.msra.mxu0 0.0
    %1440 = vmatpush.msra.mxu0 0.0
    %1441 = vmatpush.msra.mxu0 0.0
    %1442 = vmatpush.msra.mxu0 0.0
    %1443 = vmatpush.msra.mxu0 0.0
    %1444 = vmatpush.msra.mxu0 0.0
    %1445 = vmatpush.msra.mxu0 0.0
    %1446 = vmatpush.msra.mxu0 %v1342
    %1447 = vmatmul.f32.gmra.mxu0 %v111
    %v1448 = vpop.f32.mrf.mxu0
    %v1449 = vadd.f32 %v1310, %v1448
    %1450 = vmatmul.f32.gmra.mxu0 %v114
    %v1451 = vpop.f32.mrf.mxu0
    %v1452 = vadd.f32 %v1315, %v1451
    %1453 = vmatmul.f32.gmra.mxu0 %v117
    %v1454 = vpop.f32.mrf.mxu0
    %v1455 = vadd.f32 %v1320, %v1454
    %1456 = vmatmul.f32.gmra.mxu0 %v120
    %v1457 = vpop.f32.mrf.mxu0
    %v1458 = vadd.f32 %v1325, %v1457
    %1459 = vdwg.mxu0
    %v1460 = vmax.f32 %v1362, 0.0
    %v1461 = vmax.f32 %v1391, 0.0
    %v1462 = vmax.f32 %v1420, 0.0
    %v1463 = vmax.f32 %v1449, 0.0
    %v1464 = vmax.f32 %v1365, 0.0
    %v1465 = vmax.f32 %v1394, 0.0
    %v1466 = vmax.f32 %v1423, 0.0
    %v1467 = vmax.f32 %v1452, 0.0
    %v1468 = vmax.f32 %v1368, 0.0
    %v1469 = vmax.f32 %v1397, 0.0
    %v1470 = vmax.f32 %v1426, 0.0
    %v1471 = vmax.f32 %v1455, 0.0
    %v1472 = vmax.f32 %v1371, 0.0
    %v1473 = vmax.f32 %v1400, 0.0
    %v1474 = vmax.f32 %v1429, 0.0
    %v1475 = vmax.f32 %v1458, 0.0
    %1476 = vmatpush.msra.mxu0 0.0
    %1477 = vmatpush.msra.mxu0 0.0
    %1478 = vmatpush.msra.mxu0 0.0
    %1479 = vmatpush.msra.mxu0 0.0
    %1480 = vmatpush.msra.mxu0 0.0
    %1481 = vmatpush.msra.mxu0 0.0
    %1482 = vmatpush.msra.mxu0 0.0
    %1483 = vmatpush.msra.mxu0 0.0
    %1484 = vmatpush.msra.mxu0 0.0
    %1485 = vmatpush.msra.mxu0 0.0
    %1486 = vmatpush.msra.mxu0 0.0
    %1487 = vmatpush.msra.mxu0 0.0
    %1488 = vmatpush.msra.mxu0 %v1472
    %1489 = vmatpush.msra.mxu0 %v1468
    %1490 = vmatpush.msra.mxu0 %v1464
    %1491 = vmatpush.msra.mxu0 %v1460
    %1492 = vmatmul.f32.gmra.mxu0 %v270
    %v1493 = vpop.f32.mrf.mxu0
    %v1494 = vadd.f32 %v266, %v1493
    %1495 = vdwg.mxu0
    %1496 = vmatpush.msra.mxu0 0.0
    %1497 = vmatpush.msra.mxu0 0.0
    %1498 = vmatpush.msra.mxu0 0.0
    %1499 = vmatpush.msra.mxu0 0.0
    %1500 = vmatpush.msra.mxu0 0.0
    %1501 = vmatpush.msra.mxu0 0.0
    %1502 = vmatpush.msra.mxu0 0.0
    %1503 = vmatpush.msra.mxu0 0.0
    %1504 = vmatpush.msra.mxu0 0.0
    %1505 = vmatpush.msra.mxu0 0.0
    %1506 = vmatpush.msra.mxu0 0.0
    %1507 = vmatpush.msra.mxu0 0.0
    %1508 = vmatpush.msra.mxu0 %v1473
    %1509 = vmatpush.msra.mxu0 %v1469
    %1510 = vmatpush.msra.mxu0 %v1465
    %1511 = vmatpush.msra.mxu0 %v1461
    %1512 = vmatmul.f32.gmra.mxu0 %v270
    %v1513 = vpop.f32.mrf.mxu0
    %v1514 = vadd.f32 %v266, %v1513
    %1515 = vdwg.mxu0
    %1516 = vmatpush.msra.mxu0 0.0
    %1517 = vmatpush.msra.mxu0 0.0
    %1518 = vmatpush.msra.mxu0 0.0
    %1519 = vmatpush.msra.mxu0 0.0
    %1520 = vmatpush.msra.mxu0 0.0
    %1521 = vmatpush.msra.mxu0 0.0
    %1522 = vmatpush.msra.mxu0 0.0
    %1523 = vmatpush.msra.mxu0 0.0
    %1524 = vmatpush.msra.mxu0 0.0
    %1525 = vmatpush.msra.mxu0 0.0
    %1526 = vmatpush.msra.mxu0 0.0
    %1527 = vmatpush.msra.mxu0 0.0
    %1528 = vmatpush.msra.mxu0 %v1474
    %1529 = vmatpush.msra.mxu0 %v1470
    %1530 = vmatpush.msra.mxu0 %v1466
    %1531 = vmatpush.msra.mxu0 %v1462
    %1532 = vmatmul.f32.gmra.mxu0 %v270
    %v1533 = vpop.f32.mrf.mxu0
    %v1534 = vadd.f32 %v266, %v1533
    %1535 = vdwg.mxu0
    %1536 = vmatpush.msra.mxu0 0.0
    %1537 = vmatpush.msra.mxu0 0.0
    %1538 = vmatpush.msra.mxu0 0.0
    %1539 = vmatpush.msra.mxu0 0.0
    %1540 = vmatpush.msra.mxu0 0.0
    %1541 = vmatpush.msra.mxu0 0.0
    %1542 = vmatpush.msra.mxu0 0.0
    %1543 = vmatpush.msra.mxu0 0.0
    %1544 = vmatpush.msra.mxu0 0.0
    %1545 = vmatpush.msra.mxu0 0.0
    %1546 = vmatpush.msra.mxu0 0.0
    %1547 = vmatpush.msra.mxu0 0.0
    %1548 = vmatpush.msra.mxu0 %v1475
    %1549 = vmatpush.msra.mxu0 %v1471
    %1550 = vmatpush.msra.mxu0 %v1467
    %1551 = vmatpush.msra.mxu0 %v1463
    %1552 = vmatmul.f32.gmra.mxu0 %v270
    %v1553 = vpop.f32.mrf.mxu0
    %v1554 = vadd.f32 %v266, %v1553
    %1555 = vdwg.mxu0
    %s1556 = smul.u32 %s1300, 3
    %s1557 = sld [smem:[#allocation3 + %s1556]]
    %s1558 = sadd.s32 %s1556, 1
    %s1559 = sld [smem:[#allocation3 + %s1558]]
    %s1560 = sadd.s32 %s1556, 2
    %s1561 = sld [smem:[#allocation3 + %s1560]]
    %v1562 = vstv %s1557
    %v1563 = vmul.f32 %v1562, %v1298
    %v1564 = vmul.f32 %v1562, %v1299
    %v1565 = vstv %s1559
    %v1566 = vmul.f32 %v1565, %v1494
    %v1567 = vmul.f32 %v1565, %v1514
    %v1568 = vmul.f32 %v1565, %v1534
    %v1569 = vmul.f32 %v1565, %v1554
    %v1574 = vrot.slane %v1567, 4
    %v1575 = vrot.slane %v1569, 4
    %v1576 = vsel %vm122, %v1566, %v1574
    %v1577 = vsel %vm122, %v1568, %v1575
    %v1580 = vsub.f32 %v1563, %v1576
    %v1581 = vsub.f32 %v1564, %v1577
    %v1582 = vstv %s1561
    %v1583 = vmul.f32 %v1582, %v63
    %v1584 = vmul.f32 %v1582, %v64
    %v1585 = vmul.f32 %v1582, %v65
    %v1586 = vmul.f32 %v1582, %v66
    %v1591 = vrot.slane %v1584, 4
    %v1592 = vrot.slane %v1586, 4
    %v1593 = vsel %vm122, %v1583, %v1591
    %v1594 = vsel %vm122, %v1585, %v1592
    %v1597 = vadd.f32 %v1580, %v1593
    %v1598 = vadd.f32 %v1581, %v1594
    %s1599 = sadd.s32 %s73, 5
    %s1600 = smul.u32 %s1599, 32
    %s1601 = scalar_lea.vmem %s2, %s1600
    %v1602 = vld [vmem:[%s1601] sm:$0xff]
    %v1603 = vld [vmem:[%s1601 + $0x8] sm:$0xff]
    %v1604 = vld [vmem:[%s1601 + $0x10] sm:$0xff]
    %v1605 = vld [vmem:[%s1601 + $0x18] sm:$0xff]
    %1607 = vset.pattern.permute.xlu0 0
    %1608 = vperm.xlu0 %1607, %v1602
    %v1609 = vpop.permute.xlu0 %1608
    %1612 = vset.pattern.permute.xlu0 0
    %1613 = vperm.xlu0 %1612, %v1603
    %v1614 = vpop.permute.xlu0 %1613
    %1617 = vset.pattern.permute.xlu0 0
    %1618 = vperm.xlu0 %1617, %v1604
    %v1619 = vpop.permute.xlu0 %1618
    %1622 = vset.pattern.permute.xlu0 0
    %1623 = vperm.xlu0 %1622, %v1605
    %v1624 = vpop.permute.xlu0 %1623
    %1628 = vst [vmem:[#allocation1] ss:$2 sm:$0xff] %v1597
    %s1629 = scalar_lea.vmem [#allocation1], 16
    %1630 = vst [vmem:[%s1629] ss:$2 sm:$0xff] %v1598
    %v1631 = vld.sshfl [vmem:[#allocation1] sm:$0xff pattern:$0x75316420]
    %v1632 = vld.sshfl [vmem:[#allocation1 + $0x8] sm:$0xff pattern:$0x75316420]
    %v1633 = vld.sshfl [vmem:[#allocation1 + $0x10] sm:$0xff pattern:$0x75316420]
    %v1634 = vld.sshfl [vmem:[#allocation1 + $0x18] sm:$0xff pattern:$0x75316420]
    %v1635 = vsel %vm122, %v1631, 0
    %v1637 = vsel %vm122, %v1632, 0
    %v1639 = vsel %vm122, %v1633, 0
    %v1641 = vsel %vm122, %v1634, 0
    %1643 = vmatpush.msra.mxu0 0.0
    %1644 = vmatpush.msra.mxu0 0.0
    %1645 = vmatpush.msra.mxu0 0.0
    %1646 = vmatpush.msra.mxu0 0.0
    %1647 = vmatpush.msra.mxu0 0.0
    %1648 = vmatpush.msra.mxu0 0.0
    %1649 = vmatpush.msra.mxu0 0.0
    %1650 = vmatpush.msra.mxu0 0.0
    %1651 = vmatpush.msra.mxu0 0.0
    %1652 = vmatpush.msra.mxu0 0.0
    %1653 = vmatpush.msra.mxu0 0.0
    %1654 = vmatpush.msra.mxu0 0.0
    %1655 = vmatpush.msra.mxu0 0.0
    %1656 = vmatpush.msra.mxu0 0.0
    %1657 = vmatpush.msra.mxu0 0.0
    %1658 = vmatpush.msra.mxu0 %v1635
    %1659 = vmatmul.f32.gmra.mxu0 %v111
    %v1660 = vpop.f32.mrf.mxu0
    %v1661 = vadd.f32 %v1609, %v1660
    %1662 = vmatmul.f32.gmra.mxu0 %v114
    %v1663 = vpop.f32.mrf.mxu0
    %v1664 = vadd.f32 %v1614, %v1663
    %1665 = vmatmul.f32.gmra.mxu0 %v117
    %v1666 = vpop.f32.mrf.mxu0
    %v1667 = vadd.f32 %v1619, %v1666
    %1668 = vmatmul.f32.gmra.mxu0 %v120
    %v1669 = vpop.f32.mrf.mxu0
    %v1670 = vadd.f32 %v1624, %v1669
    %1671 = vdwg.mxu0
    %1672 = vmatpush.msra.mxu0 0.0
    %1673 = vmatpush.msra.mxu0 0.0
    %1674 = vmatpush.msra.mxu0 0.0
    %1675 = vmatpush.msra.mxu0 0.0
    %1676 = vmatpush.msra.mxu0 0.0
    %1677 = vmatpush.msra.mxu0 0.0
    %1678 = vmatpush.msra.mxu0 0.0
    %1679 = vmatpush.msra.mxu0 0.0
    %1680 = vmatpush.msra.mxu0 0.0
    %1681 = vmatpush.msra.mxu0 0.0
    %1682 = vmatpush.msra.mxu0 0.0
    %1683 = vmatpush.msra.mxu0 0.0
    %1684 = vmatpush.msra.mxu0 0.0
    %1685 = vmatpush.msra.mxu0 0.0
    %1686 = vmatpush.msra.mxu0 0.0
    %1687 = vmatpush.msra.mxu0 %v1637
    %1688 = vmatmul.f32.gmra.mxu0 %v111
    %v1689 = vpop.f32.mrf.mxu0
    %v1690 = vadd.f32 %v1609, %v1689
    %1691 = vmatmul.f32.gmra.mxu0 %v114
    %v1692 = vpop.f32.mrf.mxu0
    %v1693 = vadd.f32 %v1614, %v1692
    %1694 = vmatmul.f32.gmra.mxu0 %v117
    %v1695 = vpop.f32.mrf.mxu0
    %v1696 = vadd.f32 %v1619, %v1695
    %1697 = vmatmul.f32.gmra.mxu0 %v120
    %v1698 = vpop.f32.mrf.mxu0
    %v1699 = vadd.f32 %v1624, %v1698
    %1700 = vdwg.mxu0
    %1701 = vmatpush.msra.mxu0 0.0
    %1702 = vmatpush.msra.mxu0 0.0
    %1703 = vmatpush.msra.mxu0 0.0
    %1704 = vmatpush.msra.mxu0 0.0
    %1705 = vmatpush.msra.mxu0 0.0
    %1706 = vmatpush.msra.mxu0 0.0
    %1707 = vmatpush.msra.mxu0 0.0
    %1708 = vmatpush.msra.mxu0 0.0
    %1709 = vmatpush.msra.mxu0 0.0
    %1710 = vmatpush.msra.mxu0 0.0
    %1711 = vmatpush.msra.mxu0 0.0
    %1712 = vmatpush.msra.mxu0 0.0
    %1713 = vmatpush.msra.mxu0 0.0
    %1714 = vmatpush.msra.mxu0 0.0
    %1715 = vmatpush.msra.mxu0 0.0
    %1716 = vmatpush.msra.mxu0 %v1639
    %1717 = vmatmul.f32.gmra.mxu0 %v111
    %v1718 = vpop.f32.mrf.mxu0
    %v1719 = vadd.f32 %v1609, %v1718
    %1720 = vmatmul.f32.gmra.mxu0 %v114
    %v1721 = vpop.f32.mrf.mxu0
    %v1722 = vadd.f32 %v1614, %v1721
    %1723 = vmatmul.f32.gmra.mxu0 %v117
    %v1724 = vpop.f32.mrf.mxu0
    %v1725 = vadd.f32 %v1619, %v1724
    %1726 = vmatmul.f32.gmra.mxu0 %v120
    %v1727 = vpop.f32.mrf.mxu0
    %v1728 = vadd.f32 %v1624, %v1727
    %1729 = vdwg.mxu0
    %1730 = vmatpush.msra.mxu0 0.0
    %1731 = vmatpush.msra.mxu0 0.0
    %1732 = vmatpush.msra.mxu0 0.0
    %1733 = vmatpush.msra.mxu0 0.0
    %1734 = vmatpush.msra.mxu0 0.0
    %1735 = vmatpush.msra.mxu0 0.0
    %1736 = vmatpush.msra.mxu0 0.0
    %1737 = vmatpush.msra.mxu0 0.0
    %1738 = vmatpush.msra.mxu0 0.0
    %1739 = vmatpush.msra.mxu0 0.0
    %1740 = vmatpush.msra.mxu0 0.0
    %1741 = vmatpush.msra.mxu0 0.0
    %1742 = vmatpush.msra.mxu0 0.0
    %1743 = vmatpush.msra.mxu0 0.0
    %1744 = vmatpush.msra.mxu0 0.0
    %1745 = vmatpush.msra.mxu0 %v1641
    %1746 = vmatmul.f32.gmra.mxu0 %v111
    %v1747 = vpop.f32.mrf.mxu0
    %v1748 = vadd.f32 %v1609, %v1747
    %1749 = vmatmul.f32.gmra.mxu0 %v114
    %v1750 = vpop.f32.mrf.mxu0
    %v1751 = vadd.f32 %v1614, %v1750
    %1752 = vmatmul.f32.gmra.mxu0 %v117
    %v1753 = vpop.f32.mrf.mxu0
    %v1754 = vadd.f32 %v1619, %v1753
    %1755 = vmatmul.f32.gmra.mxu0 %v120
    %v1756 = vpop.f32.mrf.mxu0
    %v1757 = vadd.f32 %v1624, %v1756
    %1758 = vdwg.mxu0
    %v1759 = vmax.f32 %v1661, 0.0
    %v1760 = vmax.f32 %v1690, 0.0
    %v1761 = vmax.f32 %v1719, 0.0
    %v1762 = vmax.f32 %v1748, 0.0
    %v1763 = vmax.f32 %v1664, 0.0
    %v1764 = vmax.f32 %v1693, 0.0
    %v1765 = vmax.f32 %v1722, 0.0
    %v1766 = vmax.f32 %v1751, 0.0
    %v1767 = vmax.f32 %v1667, 0.0
    %v1768 = vmax.f32 %v1696, 0.0
    %v1769 = vmax.f32 %v1725, 0.0
    %v1770 = vmax.f32 %v1754, 0.0
    %v1771 = vmax.f32 %v1670, 0.0
    %v1772 = vmax.f32 %v1699, 0.0
    %v1773 = vmax.f32 %v1728, 0.0
    %v1774 = vmax.f32 %v1757, 0.0
    %1775 = vmatpush.msra.mxu0 0.0
    %1776 = vmatpush.msra.mxu0 0.0
    %1777 = vmatpush.msra.mxu0 0.0
    %1778 = vmatpush.msra.mxu0 0.0
    %1779 = vmatpush.msra.mxu0 0.0
    %1780 = vmatpush.msra.mxu0 0.0
    %1781 = vmatpush.msra.mxu0 0.0
    %1782 = vmatpush.msra.mxu0 0.0
    %1783 = vmatpush.msra.mxu0 0.0
    %1784 = vmatpush.msra.mxu0 0.0
    %1785 = vmatpush.msra.mxu0 0.0
    %1786 = vmatpush.msra.mxu0 0.0
    %1787 = vmatpush.msra.mxu0 %v1771
    %1788 = vmatpush.msra.mxu0 %v1767
    %1789 = vmatpush.msra.mxu0 %v1763
    %1790 = vmatpush.msra.mxu0 %v1759
    %1791 = vmatmul.f32.gmra.mxu0 %v270
    %v1792 = vpop.f32.mrf.mxu0
    %v1793 = vadd.f32 %v266, %v1792
    %1794 = vdwg.mxu0
    %1795 = vmatpush.msra.mxu0 0.0
    %1796 = vmatpush.msra.mxu0 0.0
    %1797 = vmatpush.msra.mxu0 0.0
    %1798 = vmatpush.msra.mxu0 0.0
    %1799 = vmatpush.msra.mxu0 0.0
    %1800 = vmatpush.msra.mxu0 0.0
    %1801 = vmatpush.msra.mxu0 0.0
    %1802 = vmatpush.msra.mxu0 0.0
    %1803 = vmatpush.msra.mxu0 0.0
    %1804 = vmatpush.msra.mxu0 0.0
    %1805 = vmatpush.msra.mxu0 0.0
    %1806 = vmatpush.msra.mxu0 0.0
    %1807 = vmatpush.msra.mxu0 %v1772
    %1808 = vmatpush.msra.mxu0 %v1768
    %1809 = vmatpush.msra.mxu0 %v1764
    %1810 = vmatpush.msra.mxu0 %v1760
    %1811 = vmatmul.f32.gmra.mxu0 %v270
    %v1812 = vpop.f32.mrf.mxu0
    %v1813 = vadd.f32 %v266, %v1812
    %1814 = vdwg.mxu0
    %1815 = vmatpush.msra.mxu0 0.0
    %1816 = vmatpush.msra.mxu0 0.0
    %1817 = vmatpush.msra.mxu0 0.0
    %1818 = vmatpush.msra.mxu0 0.0
    %1819 = vmatpush.msra.mxu0 0.0
    %1820 = vmatpush.msra.mxu0 0.0
    %1821 = vmatpush.msra.mxu0 0.0
    %1822 = vmatpush.msra.mxu0 0.0
    %1823 = vmatpush.msra.mxu0 0.0
    %1824 = vmatpush.msra.mxu0 0.0
    %1825 = vmatpush.msra.mxu0 0.0
    %1826 = vmatpush.msra.mxu0 0.0
    %1827 = vmatpush.msra.mxu0 %v1773
    %1828 = vmatpush.msra.mxu0 %v1769
    %1829 = vmatpush.msra.mxu0 %v1765
    %1830 = vmatpush.msra.mxu0 %v1761
    %1831 = vmatmul.f32.gmra.mxu0 %v270
    %v1832 = vpop.f32.mrf.mxu0
    %v1833 = vadd.f32 %v266, %v1832
    %1834 = vdwg.mxu0
    %1835 = vmatpush.msra.mxu0 0.0
    %1836 = vmatpush.msra.mxu0 0.0
    %1837 = vmatpush.msra.mxu0 0.0
    %1838 = vmatpush.msra.mxu0 0.0
    %1839 = vmatpush.msra.mxu0 0.0
    %1840 = vmatpush.msra.mxu0 0.0
    %1841 = vmatpush.msra.mxu0 0.0
    %1842 = vmatpush.msra.mxu0 0.0
    %1843 = vmatpush.msra.mxu0 0.0
    %1844 = vmatpush.msra.mxu0 0.0
    %1845 = vmatpush.msra.mxu0 0.0
    %1846 = vmatpush.msra.mxu0 0.0
    %1847 = vmatpush.msra.mxu0 %v1774
    %1848 = vmatpush.msra.mxu0 %v1770
    %1849 = vmatpush.msra.mxu0 %v1766
    %1850 = vmatpush.msra.mxu0 %v1762
    %1851 = vmatmul.f32.gmra.mxu0 %v270
    %v1852 = vpop.f32.mrf.mxu0
    %v1853 = vadd.f32 %v266, %v1852
    %1854 = vdwg.mxu0
    %s1855 = smul.u32 %s1599, 3
    %s1856 = sld [smem:[#allocation3 + %s1855]]
    %s1857 = sadd.s32 %s1855, 1
    %s1858 = sld [smem:[#allocation3 + %s1857]]
    %s1859 = sadd.s32 %s1855, 2
    %s1860 = sld [smem:[#allocation3 + %s1859]]
    %v1861 = vstv %s1856
    %v1862 = vmul.f32 %v1861, %v1597
    %v1863 = vmul.f32 %v1861, %v1598
    %v1864 = vstv %s1858
    %v1865 = vmul.f32 %v1864, %v1793
    %v1866 = vmul.f32 %v1864, %v1813
    %v1867 = vmul.f32 %v1864, %v1833
    %v1868 = vmul.f32 %v1864, %v1853
    %v1873 = vrot.slane %v1866, 4
    %v1874 = vrot.slane %v1868, 4
    %v1875 = vsel %vm122, %v1865, %v1873
    %v1876 = vsel %vm122, %v1867, %v1874
    %v1879 = vsub.f32 %v1862, %v1875
    %v1880 = vsub.f32 %v1863, %v1876
    %v1881 = vstv %s1860
    %v1882 = vmul.f32 %v1881, %v63
    %v1883 = vmul.f32 %v1881, %v64
    %v1884 = vmul.f32 %v1881, %v65
    %v1885 = vmul.f32 %v1881, %v66
    %1890 = vst.sshfl [vmem:[#allocation1] sm:$0xff pattern:$0x75316420] %v1882
    %1891 = vst.sshfl [vmem:[#allocation1 + $0x8] sm:$0xff pattern:$0x75316420] %v1883
    %1892 = vst.sshfl [vmem:[#allocation1 + $0x10] sm:$0xff pattern:$0x75316420] %v1884
    %1893 = vst.sshfl [vmem:[#allocation1 + $0x18] sm:$0xff pattern:$0x75316420] %v1885
    %s1894 = scalar_lea.vmem [#allocation1], 1
    %v1895 = vld [vmem:[%s1894] ss:$2 sm:$0xff]
    %s1896 = scalar_lea.vmem [#allocation1], 17
    %v1897 = vld [vmem:[%s1896] ss:$2 sm:$0xff]
    %v1900 = vadd.f32 %v1879, %v1895
    %v1901 = vadd.f32 %v1880, %v1897
    %s1902 = sadd.s32 %s73, 6
    %s1903 = smul.u32 %s1902, 32
    %s1904 = scalar_lea.vmem %s2, %s1903
    %v1905 = vld [vmem:[%s1904] sm:$0xff]
    %v1906 = vld [vmem:[%s1904 + $0x8] sm:$0xff]
    %v1907 = vld [vmem:[%s1904 + $0x10] sm:$0xff]
    %v1908 = vld [vmem:[%s1904 + $0x18] sm:$0xff]
    %1910 = vset.pattern.permute.xlu0 0
    %1911 = vperm.xlu0 %1910, %v1905
    %v1912 = vpop.permute.xlu0 %1911
    %1915 = vset.pattern.permute.xlu0 0
    %1916 = vperm.xlu0 %1915, %v1906
    %v1917 = vpop.permute.xlu0 %1916
    %1920 = vset.pattern.permute.xlu0 0
    %1921 = vperm.xlu0 %1920, %v1907
    %v1922 = vpop.permute.xlu0 %1921
    %1925 = vset.pattern.permute.xlu0 0
    %1926 = vperm.xlu0 %1925, %v1908
    %v1927 = vpop.permute.xlu0 %1926
    %1931 = vst [vmem:[#allocation1] ss:$2 sm:$0xff] %v1900
    %s1932 = scalar_lea.vmem [#allocation1], 16
    %1933 = vst [vmem:[%s1932] ss:$2 sm:$0xff] %v1901
    %v1934 = vld.sshfl [vmem:[#allocation1] sm:$0xff pattern:$0x75316420]
    %v1935 = vld.sshfl [vmem:[#allocation1 + $0x8] sm:$0xff pattern:$0x75316420]
    %v1936 = vld.sshfl [vmem:[#allocation1 + $0x10] sm:$0xff pattern:$0x75316420]
    %v1937 = vld.sshfl [vmem:[#allocation1 + $0x18] sm:$0xff pattern:$0x75316420]
    %v1938 = vsel %vm122, %v1934, 0
    %v1940 = vsel %vm122, %v1935, 0
    %v1942 = vsel %vm122, %v1936, 0
    %v1944 = vsel %vm122, %v1937, 0
    %1946 = vmatpush.msra.mxu0 0.0
    %1947 = vmatpush.msra.mxu0 0.0
    %1948 = vmatpush.msra.mxu0 0.0
    %1949 = vmatpush.msra.mxu0 0.0
    %1950 = vmatpush.msra.mxu0 0.0
    %1951 = vmatpush.msra.mxu0 0.0
    %1952 = vmatpush.msra.mxu0 0.0
    %1953 = vmatpush.msra.mxu0 0.0
    %1954 = vmatpush.msra.mxu0 0.0
    %1955 = vmatpush.msra.mxu0 0.0
    %1956 = vmatpush.msra.mxu0 0.0
    %1957 = vmatpush.msra.mxu0 0.0
    %1958 = vmatpush.msra.mxu0 0.0
    %1959 = vmatpush.msra.mxu0 0.0
    %1960 = vmatpush.msra.mxu0 0.0
    %1961 = vmatpush.msra.mxu0 %v1938
    %1962 = vmatmul.f32.gmra.mxu0 %v111
    %v1963 = vpop.f32.mrf.mxu0
    %v1964 = vadd.f32 %v1912, %v1963
    %1965 = vmatmul.f32.gmra.mxu0 %v114
    %v1966 = vpop.f32.mrf.mxu0
    %v1967 = vadd.f32 %v1917, %v1966
    %1968 = vmatmul.f32.gmra.mxu0 %v117
    %v1969 = vpop.f32.mrf.mxu0
    %v1970 = vadd.f32 %v1922, %v1969
    %1971 = vmatmul.f32.gmra.mxu0 %v120
    %v1972 = vpop.f32.mrf.mxu0
    %v1973 = vadd.f32 %v1927, %v1972
    %1974 = vdwg.mxu0
    %1975 = vmatpush.msra.mxu0 0.0
    %1976 = vmatpush.msra.mxu0 0.0
    %1977 = vmatpush.msra.mxu0 0.0
    %1978 = vmatpush.msra.mxu0 0.0
    %1979 = vmatpush.msra.mxu0 0.0
    %1980 = vmatpush.msra.mxu0 0.0
    %1981 = vmatpush.msra.mxu0 0.0
    %1982 = vmatpush.msra.mxu0 0.0
    %1983 = vmatpush.msra.mxu0 0.0
    %1984 = vmatpush.msra.mxu0 0.0
    %1985 = vmatpush.msra.mxu0 0.0
    %1986 = vmatpush.msra.mxu0 0.0
    %1987 = vmatpush.msra.mxu0 0.0
    %1988 = vmatpush.msra.mxu0 0.0
    %1989 = vmatpush.msra.mxu0 0.0
    %1990 = vmatpush.msra.mxu0 %v1940
    %1991 = vmatmul.f32.gmra.mxu0 %v111
    %v1992 = vpop.f32.mrf.mxu0
    %v1993 = vadd.f32 %v1912, %v1992
    %1994 = vmatmul.f32.gmra.mxu0 %v114
    %v1995 = vpop.f32.mrf.mxu0
    %v1996 = vadd.f32 %v1917, %v1995
    %1997 = vmatmul.f32.gmra.mxu0 %v117
    %v1998 = vpop.f32.mrf.mxu0
    %v1999 = vadd.f32 %v1922, %v1998
    %2000 = vmatmul.f32.gmra.mxu0 %v120
    %v2001 = vpop.f32.mrf.mxu0
    %v2002 = vadd.f32 %v1927, %v2001
    %2003 = vdwg.mxu0
    %2004 = vmatpush.msra.mxu0 0.0
    %2005 = vmatpush.msra.mxu0 0.0
    %2006 = vmatpush.msra.mxu0 0.0
    %2007 = vmatpush.msra.mxu0 0.0
    %2008 = vmatpush.msra.mxu0 0.0
    %2009 = vmatpush.msra.mxu0 0.0
    %2010 = vmatpush.msra.mxu0 0.0
    %2011 = vmatpush.msra.mxu0 0.0
    %2012 = vmatpush.msra.mxu0 0.0
    %2013 = vmatpush.msra.mxu0 0.0
    %2014 = vmatpush.msra.mxu0 0.0
    %2015 = vmatpush.msra.mxu0 0.0
    %2016 = vmatpush.msra.mxu0 0.0
    %2017 = vmatpush.msra.mxu0 0.0
    %2018 = vmatpush.msra.mxu0 0.0
    %2019 = vmatpush.msra.mxu0 %v1942
    %2020 = vmatmul.f32.gmra.mxu0 %v111
    %v2021 = vpop.f32.mrf.mxu0
    %v2022 = vadd.f32 %v1912, %v2021
    %2023 = vmatmul.f32.gmra.mxu0 %v114
    %v2024 = vpop.f32.mrf.mxu0
    %v2025 = vadd.f32 %v1917, %v2024
    %2026 = vmatmul.f32.gmra.mxu0 %v117
    %v2027 = vpop.f32.mrf.mxu0
    %v2028 = vadd.f32 %v1922, %v2027
    %2029 = vmatmul.f32.gmra.mxu0 %v120
    %v2030 = vpop.f32.mrf.mxu0
    %v2031 = vadd.f32 %v1927, %v2030
    %2032 = vdwg.mxu0
    %2033 = vmatpush.msra.mxu0 0.0
    %2034 = vmatpush.msra.mxu0 0.0
    %2035 = vmatpush.msra.mxu0 0.0
    %2036 = vmatpush.msra.mxu0 0.0
    %2037 = vmatpush.msra.mxu0 0.0
    %2038 = vmatpush.msra.mxu0 0.0
    %2039 = vmatpush.msra.mxu0 0.0
    %2040 = vmatpush.msra.mxu0 0.0
    %2041 = vmatpush.msra.mxu0 0.0
    %2042 = vmatpush.msra.mxu0 0.0
    %2043 = vmatpush.msra.mxu0 0.0
    %2044 = vmatpush.msra.mxu0 0.0
    %2045 = vmatpush.msra.mxu0 0.0
    %2046 = vmatpush.msra.mxu0 0.0
    %2047 = vmatpush.msra.mxu0 0.0
    %2048 = vmatpush.msra.mxu0 %v1944
    %2049 = vmatmul.f32.gmra.mxu0 %v111
    %v2050 = vpop.f32.mrf.mxu0
    %v2051 = vadd.f32 %v1912, %v2050
    %2052 = vmatmul.f32.gmra.mxu0 %v114
    %v2053 = vpop.f32.mrf.mxu0
    %v2054 = vadd.f32 %v1917, %v2053
    %2055 = vmatmul.f32.gmra.mxu0 %v117
    %v2056 = vpop.f32.mrf.mxu0
    %v2057 = vadd.f32 %v1922, %v2056
    %2058 = vmatmul.f32.gmra.mxu0 %v120
    %v2059 = vpop.f32.mrf.mxu0
    %v2060 = vadd.f32 %v1927, %v2059
    %2061 = vdwg.mxu0
    %v2062 = vmax.f32 %v1964, 0.0
    %v2063 = vmax.f32 %v1993, 0.0
    %v2064 = vmax.f32 %v2022, 0.0
    %v2065 = vmax.f32 %v2051, 0.0
    %v2066 = vmax.f32 %v1967, 0.0
    %v2067 = vmax.f32 %v1996, 0.0
    %v2068 = vmax.f32 %v2025, 0.0
    %v2069 = vmax.f32 %v2054, 0.0
    %v2070 = vmax.f32 %v1970, 0.0
    %v2071 = vmax.f32 %v1999, 0.0
    %v2072 = vmax.f32 %v2028, 0.0
    %v2073 = vmax.f32 %v2057, 0.0
    %v2074 = vmax.f32 %v1973, 0.0
    %v2075 = vmax.f32 %v2002, 0.0
    %v2076 = vmax.f32 %v2031, 0.0
    %v2077 = vmax.f32 %v2060, 0.0
    %2078 = vmatpush.msra.mxu0 0.0
    %2079 = vmatpush.msra.mxu0 0.0
    %2080 = vmatpush.msra.mxu0 0.0
    %2081 = vmatpush.msra.mxu0 0.0
    %2082 = vmatpush.msra.mxu0 0.0
    %2083 = vmatpush.msra.mxu0 0.0
    %2084 = vmatpush.msra.mxu0 0.0
    %2085 = vmatpush.msra.mxu0 0.0
    %2086 = vmatpush.msra.mxu0 0.0
    %2087 = vmatpush.msra.mxu0 0.0
    %2088 = vmatpush.msra.mxu0 0.0
    %2089 = vmatpush.msra.mxu0 0.0
    %2090 = vmatpush.msra.mxu0 %v2074
    %2091 = vmatpush.msra.mxu0 %v2070
    %2092 = vmatpush.msra.mxu0 %v2066
    %2093 = vmatpush.msra.mxu0 %v2062
    %2094 = vmatmul.f32.gmra.mxu0 %v270
    %v2095 = vpop.f32.mrf.mxu0
    %v2096 = vadd.f32 %v266, %v2095
    %2097 = vdwg.mxu0
    %2098 = vmatpush.msra.mxu0 0.0
    %2099 = vmatpush.msra.mxu0 0.0
    %2100 = vmatpush.msra.mxu0 0.0
    %2101 = vmatpush.msra.mxu0 0.0
    %2102 = vmatpush.msra.mxu0 0.0
    %2103 = vmatpush.msra.mxu0 0.0
    %2104 = vmatpush.msra.mxu0 0.0
    %2105 = vmatpush.msra.mxu0 0.0
    %2106 = vmatpush.msra.mxu0 0.0
    %2107 = vmatpush.msra.mxu0 0.0
    %2108 = vmatpush.msra.mxu0 0.0
    %2109 = vmatpush.msra.mxu0 0.0
    %2110 = vmatpush.msra.mxu0 %v2075
    %2111 = vmatpush.msra.mxu0 %v2071
    %2112 = vmatpush.msra.mxu0 %v2067
    %2113 = vmatpush.msra.mxu0 %v2063
    %2114 = vmatmul.f32.gmra.mxu0 %v270
    %v2115 = vpop.f32.mrf.mxu0
    %v2116 = vadd.f32 %v266, %v2115
    %2117 = vdwg.mxu0
    %2118 = vmatpush.msra.mxu0 0.0
    %2119 = vmatpush.msra.mxu0 0.0
    %2120 = vmatpush.msra.mxu0 0.0
    %2121 = vmatpush.msra.mxu0 0.0
    %2122 = vmatpush.msra.mxu0 0.0
    %2123 = vmatpush.msra.mxu0 0.0
    %2124 = vmatpush.msra.mxu0 0.0
    %2125 = vmatpush.msra.mxu0 0.0
    %2126 = vmatpush.msra.mxu0 0.0
    %2127 = vmatpush.msra.mxu0 0.0
    %2128 = vmatpush.msra.mxu0 0.0
    %2129 = vmatpush.msra.mxu0 0.0
    %2130 = vmatpush.msra.mxu0 %v2076
    %2131 = vmatpush.msra.mxu0 %v2072
    %2132 = vmatpush.msra.mxu0 %v2068
    %2133 = vmatpush.msra.mxu0 %v2064
    %2134 = vmatmul.f32.gmra.mxu0 %v270
    %v2135 = vpop.f32.mrf.mxu0
    %v2136 = vadd.f32 %v266, %v2135
    %2137 = vdwg.mxu0
    %2138 = vmatpush.msra.mxu0 0.0
    %2139 = vmatpush.msra.mxu0 0.0
    %2140 = vmatpush.msra.mxu0 0.0
    %2141 = vmatpush.msra.mxu0 0.0
    %2142 = vmatpush.msra.mxu0 0.0
    %2143 = vmatpush.msra.mxu0 0.0
    %2144 = vmatpush.msra.mxu0 0.0
    %2145 = vmatpush.msra.mxu0 0.0
    %2146 = vmatpush.msra.mxu0 0.0
    %2147 = vmatpush.msra.mxu0 0.0
    %2148 = vmatpush.msra.mxu0 0.0
    %2149 = vmatpush.msra.mxu0 0.0
    %2150 = vmatpush.msra.mxu0 %v2077
    %2151 = vmatpush.msra.mxu0 %v2073
    %2152 = vmatpush.msra.mxu0 %v2069
    %2153 = vmatpush.msra.mxu0 %v2065
    %2154 = vmatmul.f32.gmra.mxu0 %v270
    %v2155 = vpop.f32.mrf.mxu0
    %v2156 = vadd.f32 %v266, %v2155
    %2157 = vdwg.mxu0
    %s2158 = smul.u32 %s1902, 3
    %s2159 = sld [smem:[#allocation3 + %s2158]]
    %s2160 = sadd.s32 %s2158, 1
    %s2161 = sld [smem:[#allocation3 + %s2160]]
    %s2162 = sadd.s32 %s2158, 2
    %s2163 = sld [smem:[#allocation3 + %s2162]]
    %v2164 = vstv %s2159
    %v2165 = vmul.f32 %v2164, %v1900
    %v2166 = vmul.f32 %v2164, %v1901
    %v2167 = vstv %s2161
    %v2168 = vmul.f32 %v2167, %v2096
    %v2169 = vmul.f32 %v2167, %v2116
    %v2170 = vmul.f32 %v2167, %v2136
    %v2171 = vmul.f32 %v2167, %v2156
    %v2176 = vrot.slane %v2169, 4
    %v2177 = vrot.slane %v2171, 4
    %v2178 = vsel %vm122, %v2168, %v2176
    %v2179 = vsel %vm122, %v2170, %v2177
    %v2182 = vsub.f32 %v2165, %v2178
    %v2183 = vsub.f32 %v2166, %v2179
    %v2184 = vstv %s2163
    %v2185 = vmul.f32 %v2184, %v67
    %v2186 = vmul.f32 %v2184, %v68
    %v2187 = vmul.f32 %v2184, %v69
    %v2188 = vmul.f32 %v2184, %v70
    %v2193 = vrot.slane %v2186, 4
    %v2194 = vrot.slane %v2188, 4
    %v2195 = vsel %vm122, %v2185, %v2193
    %v2196 = vsel %vm122, %v2187, %v2194
    %v2199 = vadd.f32 %v2182, %v2195
    %v2200 = vadd.f32 %v2183, %v2196
    %s2201 = sadd.s32 %s73, 7
    %s2202 = smul.u32 %s2201, 32
    %s2203 = scalar_lea.vmem %s2, %s2202
    %v2204 = vld [vmem:[%s2203] sm:$0xff]
    %v2205 = vld [vmem:[%s2203 + $0x8] sm:$0xff]
    %v2206 = vld [vmem:[%s2203 + $0x10] sm:$0xff]
    %v2207 = vld [vmem:[%s2203 + $0x18] sm:$0xff]
    %2209 = vset.pattern.permute.xlu0 0
    %2210 = vperm.xlu0 %2209, %v2204
    %v2211 = vpop.permute.xlu0 %2210
    %2214 = vset.pattern.permute.xlu0 0
    %2215 = vperm.xlu0 %2214, %v2205
    %v2216 = vpop.permute.xlu0 %2215
    %2219 = vset.pattern.permute.xlu0 0
    %2220 = vperm.xlu0 %2219, %v2206
    %v2221 = vpop.permute.xlu0 %2220
    %2224 = vset.pattern.permute.xlu0 0
    %2225 = vperm.xlu0 %2224, %v2207
    %v2226 = vpop.permute.xlu0 %2225
    %2230 = vst [vmem:[#allocation1] ss:$2 sm:$0xff] %v2199
    %s2231 = scalar_lea.vmem [#allocation1], 16
    %2232 = vst [vmem:[%s2231] ss:$2 sm:$0xff] %v2200
    %v2233 = vld.sshfl [vmem:[#allocation1] sm:$0xff pattern:$0x75316420]
    %v2234 = vld.sshfl [vmem:[#allocation1 + $0x8] sm:$0xff pattern:$0x75316420]
    %v2235 = vld.sshfl [vmem:[#allocation1 + $0x10] sm:$0xff pattern:$0x75316420]
    %v2236 = vld.sshfl [vmem:[#allocation1 + $0x18] sm:$0xff pattern:$0x75316420]
    %v2237 = vsel %vm122, %v2233, 0
    %v2239 = vsel %vm122, %v2234, 0
    %v2241 = vsel %vm122, %v2235, 0
    %v2243 = vsel %vm122, %v2236, 0
    %2245 = vmatpush.msra.mxu0 0.0
    %2246 = vmatpush.msra.mxu0 0.0
    %2247 = vmatpush.msra.mxu0 0.0
    %2248 = vmatpush.msra.mxu0 0.0
    %2249 = vmatpush.msra.mxu0 0.0
    %2250 = vmatpush.msra.mxu0 0.0
    %2251 = vmatpush.msra.mxu0 0.0
    %2252 = vmatpush.msra.mxu0 0.0
    %2253 = vmatpush.msra.mxu0 0.0
    %2254 = vmatpush.msra.mxu0 0.0
    %2255 = vmatpush.msra.mxu0 0.0
    %2256 = vmatpush.msra.mxu0 0.0
    %2257 = vmatpush.msra.mxu0 0.0
    %2258 = vmatpush.msra.mxu0 0.0
    %2259 = vmatpush.msra.mxu0 0.0
    %2260 = vmatpush.msra.mxu0 %v2237
    %2261 = vmatmul.f32.gmra.mxu0 %v111
    %v2262 = vpop.f32.mrf.mxu0
    %v2263 = vadd.f32 %v2211, %v2262
    %2264 = vmatmul.f32.gmra.mxu0 %v114
    %v2265 = vpop.f32.mrf.mxu0
    %v2266 = vadd.f32 %v2216, %v2265
    %2267 = vmatmul.f32.gmra.mxu0 %v117
    %v2268 = vpop.f32.mrf.mxu0
    %v2269 = vadd.f32 %v2221, %v2268
    %2270 = vmatmul.f32.gmra.mxu0 %v120
    %v2271 = vpop.f32.mrf.mxu0
    %v2272 = vadd.f32 %v2226, %v2271
    %2273 = vdwg.mxu0
    %2274 = vmatpush.msra.mxu0 0.0
    %2275 = vmatpush.msra.mxu0 0.0
    %2276 = vmatpush.msra.mxu0 0.0
    %2277 = vmatpush.msra.mxu0 0.0
    %2278 = vmatpush.msra.mxu0 0.0
    %2279 = vmatpush.msra.mxu0 0.0
    %2280 = vmatpush.msra.mxu0 0.0
    %2281 = vmatpush.msra.mxu0 0.0
    %2282 = vmatpush.msra.mxu0 0.0
    %2283 = vmatpush.msra.mxu0 0.0
    %2284 = vmatpush.msra.mxu0 0.0
    %2285 = vmatpush.msra.mxu0 0.0
    %2286 = vmatpush.msra.mxu0 0.0
    %2287 = vmatpush.msra.mxu0 0.0
    %2288 = vmatpush.msra.mxu0 0.0
    %2289 = vmatpush.msra.mxu0 %v2239
    %2290 = vmatmul.f32.gmra.mxu0 %v111
    %v2291 = vpop.f32.mrf.mxu0
    %v2292 = vadd.f32 %v2211, %v2291
    %2293 = vmatmul.f32.gmra.mxu0 %v114
    %v2294 = vpop.f32.mrf.mxu0
    %v2295 = vadd.f32 %v2216, %v2294
    %2296 = vmatmul.f32.gmra.mxu0 %v117
    %v2297 = vpop.f32.mrf.mxu0
    %v2298 = vadd.f32 %v2221, %v2297
    %2299 = vmatmul.f32.gmra.mxu0 %v120
    %v2300 = vpop.f32.mrf.mxu0
    %v2301 = vadd.f32 %v2226, %v2300
    %2302 = vdwg.mxu0
    %2303 = vmatpush.msra.mxu0 0.0
    %2304 = vmatpush.msra.mxu0 0.0
    %2305 = vmatpush.msra.mxu0 0.0
    %2306 = vmatpush.msra.mxu0 0.0
    %2307 = vmatpush.msra.mxu0 0.0
    %2308 = vmatpush.msra.mxu0 0.0
    %2309 = vmatpush.msra.mxu0 0.0
    %2310 = vmatpush.msra.mxu0 0.0
    %2311 = vmatpush.msra.mxu0 0.0
    %2312 = vmatpush.msra.mxu0 0.0
    %2313 = vmatpush.msra.mxu0 0.0
    %2314 = vmatpush.msra.mxu0 0.0
    %2315 = vmatpush.msra.mxu0 0.0
    %2316 = vmatpush.msra.mxu0 0.0
    %2317 = vmatpush.msra.mxu0 0.0
    %2318 = vmatpush.msra.mxu0 %v2241
    %2319 = vmatmul.f32.gmra.mxu0 %v111
    %v2320 = vpop.f32.mrf.mxu0
    %v2321 = vadd.f32 %v2211, %v2320
    %2322 = vmatmul.f32.gmra.mxu0 %v114
    %v2323 = vpop.f32.mrf.mxu0
    %v2324 = vadd.f32 %v2216, %v2323
    %2325 = vmatmul.f32.gmra.mxu0 %v117
    %v2326 = vpop.f32.mrf.mxu0
    %v2327 = vadd.f32 %v2221, %v2326
    %2328 = vmatmul.f32.gmra.mxu0 %v120
    %v2329 = vpop.f32.mrf.mxu0
    %v2330 = vadd.f32 %v2226, %v2329
    %2331 = vdwg.mxu0
    %2332 = vmatpush.msra.mxu0 0.0
    %2333 = vmatpush.msra.mxu0 0.0
    %2334 = vmatpush.msra.mxu0 0.0
    %2335 = vmatpush.msra.mxu0 0.0
    %2336 = vmatpush.msra.mxu0 0.0
    %2337 = vmatpush.msra.mxu0 0.0
    %2338 = vmatpush.msra.mxu0 0.0
    %2339 = vmatpush.msra.mxu0 0.0
    %2340 = vmatpush.msra.mxu0 0.0
    %2341 = vmatpush.msra.mxu0 0.0
    %2342 = vmatpush.msra.mxu0 0.0
    %2343 = vmatpush.msra.mxu0 0.0
    %2344 = vmatpush.msra.mxu0 0.0
    %2345 = vmatpush.msra.mxu0 0.0
    %2346 = vmatpush.msra.mxu0 0.0
    %2347 = vmatpush.msra.mxu0 %v2243
    %2348 = vmatmul.f32.gmra.mxu0 %v111
    %v2349 = vpop.f32.mrf.mxu0
    %v2350 = vadd.f32 %v2211, %v2349
    %2351 = vmatmul.f32.gmra.mxu0 %v114
    %v2352 = vpop.f32.mrf.mxu0
    %v2353 = vadd.f32 %v2216, %v2352
    %2354 = vmatmul.f32.gmra.mxu0 %v117
    %v2355 = vpop.f32.mrf.mxu0
    %v2356 = vadd.f32 %v2221, %v2355
    %2357 = vmatmul.f32.gmra.mxu0 %v120
    %v2358 = vpop.f32.mrf.mxu0
    %v2359 = vadd.f32 %v2226, %v2358
    %2360 = vdwg.mxu0
    %v2361 = vmax.f32 %v2263, 0.0
    %v2362 = vmax.f32 %v2292, 0.0
    %v2363 = vmax.f32 %v2321, 0.0
    %v2364 = vmax.f32 %v2350, 0.0
    %v2365 = vmax.f32 %v2266, 0.0
    %v2366 = vmax.f32 %v2295, 0.0
    %v2367 = vmax.f32 %v2324, 0.0
    %v2368 = vmax.f32 %v2353, 0.0
    %v2369 = vmax.f32 %v2269, 0.0
    %v2370 = vmax.f32 %v2298, 0.0
    %v2371 = vmax.f32 %v2327, 0.0
    %v2372 = vmax.f32 %v2356, 0.0
    %v2373 = vmax.f32 %v2272, 0.0
    %v2374 = vmax.f32 %v2301, 0.0
    %v2375 = vmax.f32 %v2330, 0.0
    %v2376 = vmax.f32 %v2359, 0.0
    %2377 = vmatpush.msra.mxu0 0.0
    %2378 = vmatpush.msra.mxu0 0.0
    %2379 = vmatpush.msra.mxu0 0.0
    %2380 = vmatpush.msra.mxu0 0.0
    %2381 = vmatpush.msra.mxu0 0.0
    %2382 = vmatpush.msra.mxu0 0.0
    %2383 = vmatpush.msra.mxu0 0.0
    %2384 = vmatpush.msra.mxu0 0.0
    %2385 = vmatpush.msra.mxu0 0.0
    %2386 = vmatpush.msra.mxu0 0.0
    %2387 = vmatpush.msra.mxu0 0.0
    %2388 = vmatpush.msra.mxu0 0.0
    %2389 = vmatpush.msra.mxu0 %v2373
    %2390 = vmatpush.msra.mxu0 %v2369
    %2391 = vmatpush.msra.mxu0 %v2365
    %2392 = vmatpush.msra.mxu0 %v2361
    %2393 = vmatmul.f32.gmra.mxu0 %v270
    %v2394 = vpop.f32.mrf.mxu0
    %v2395 = vadd.f32 %v266, %v2394
    %2396 = vdwg.mxu0
    %2397 = vmatpush.msra.mxu0 0.0
    %2398 = vmatpush.msra.mxu0 0.0
    %2399 = vmatpush.msra.mxu0 0.0
    %2400 = vmatpush.msra.mxu0 0.0
    %2401 = vmatpush.msra.mxu0 0.0
    %2402 = vmatpush.msra.mxu0 0.0
    %2403 = vmatpush.msra.mxu0 0.0
    %2404 = vmatpush.msra.mxu0 0.0
    %2405 = vmatpush.msra.mxu0 0.0
    %2406 = vmatpush.msra.mxu0 0.0
    %2407 = vmatpush.msra.mxu0 0.0
    %2408 = vmatpush.msra.mxu0 0.0
    %2409 = vmatpush.msra.mxu0 %v2374
    %2410 = vmatpush.msra.mxu0 %v2370
    %2411 = vmatpush.msra.mxu0 %v2366
    %2412 = vmatpush.msra.mxu0 %v2362
    %2413 = vmatmul.f32.gmra.mxu0 %v270
    %v2414 = vpop.f32.mrf.mxu0
    %v2415 = vadd.f32 %v266, %v2414
    %2416 = vdwg.mxu0
    %2417 = vmatpush.msra.mxu0 0.0
    %2418 = vmatpush.msra.mxu0 0.0
    %2419 = vmatpush.msra.mxu0 0.0
    %2420 = vmatpush.msra.mxu0 0.0
    %2421 = vmatpush.msra.mxu0 0.0
    %2422 = vmatpush.msra.mxu0 0.0
    %2423 = vmatpush.msra.mxu0 0.0
    %2424 = vmatpush.msra.mxu0 0.0
    %2425 = vmatpush.msra.mxu0 0.0
    %2426 = vmatpush.msra.mxu0 0.0
    %2427 = vmatpush.msra.mxu0 0.0
    %2428 = vmatpush.msra.mxu0 0.0
    %2429 = vmatpush.msra.mxu0 %v2375
    %2430 = vmatpush.msra.mxu0 %v2371
    %2431 = vmatpush.msra.mxu0 %v2367
    %2432 = vmatpush.msra.mxu0 %v2363
    %2433 = vmatmul.f32.gmra.mxu0 %v270
    %v2434 = vpop.f32.mrf.mxu0
    %v2435 = vadd.f32 %v266, %v2434
    %2436 = vdwg.mxu0
    %2437 = vmatpush.msra.mxu0 0.0
    %2438 = vmatpush.msra.mxu0 0.0
    %2439 = vmatpush.msra.mxu0 0.0
    %2440 = vmatpush.msra.mxu0 0.0
    %2441 = vmatpush.msra.mxu0 0.0
    %2442 = vmatpush.msra.mxu0 0.0
    %2443 = vmatpush.msra.mxu0 0.0
    %2444 = vmatpush.msra.mxu0 0.0
    %2445 = vmatpush.msra.mxu0 0.0
    %2446 = vmatpush.msra.mxu0 0.0
    %2447 = vmatpush.msra.mxu0 0.0
    %2448 = vmatpush.msra.mxu0 0.0
    %2449 = vmatpush.msra.mxu0 %v2376
    %2450 = vmatpush.msra.mxu0 %v2372
    %2451 = vmatpush.msra.mxu0 %v2368
    %2452 = vmatpush.msra.mxu0 %v2364
    %2453 = vmatmul.f32.gmra.mxu0 %v270
    %v2454 = vpop.f32.mrf.mxu0
    %v2455 = vadd.f32 %v266, %v2454
    %2456 = vdwg.mxu0
    %s2457 = smul.u32 %s2201, 3
    %s2458 = sld [smem:[#allocation3 + %s2457]]
    %s2459 = sadd.s32 %s2457, 1
    %s2460 = sld [smem:[#allocation3 + %s2459]]
    %s2461 = sadd.s32 %s2457, 2
    %s2462 = sld [smem:[#allocation3 + %s2461]]
    %v2463 = vstv %s2458
    %v2464 = vmul.f32 %v2463, %v2199
    %v2465 = vmul.f32 %v2463, %v2200
    %v2466 = vstv %s2460
    %v2467 = vmul.f32 %v2466, %v2395
    %v2468 = vmul.f32 %v2466, %v2415
    %v2469 = vmul.f32 %v2466, %v2435
    %v2470 = vmul.f32 %v2466, %v2455
    %v2475 = vrot.slane %v2468, 4
    %v2476 = vrot.slane %v2470, 4
    %v2477 = vsel %vm122, %v2467, %v2475
    %v2478 = vsel %vm122, %v2469, %v2476
    %v2481 = vsub.f32 %v2464, %v2477
    %v2482 = vsub.f32 %v2465, %v2478
    %v2483 = vstv %s2462
    %v2484 = vmul.f32 %v2483, %v67
    %v2485 = vmul.f32 %v2483, %v68
    %v2486 = vmul.f32 %v2483, %v69
    %v2487 = vmul.f32 %v2483, %v70
    %2492 = vst.sshfl [vmem:[#allocation1] sm:$0xff pattern:$0x75316420] %v2484
    %2493 = vst.sshfl [vmem:[#allocation1 + $0x8] sm:$0xff pattern:$0x75316420] %v2485
    %2494 = vst.sshfl [vmem:[#allocation1 + $0x10] sm:$0xff pattern:$0x75316420] %v2486
    %2495 = vst.sshfl [vmem:[#allocation1 + $0x18] sm:$0xff pattern:$0x75316420] %v2487
    %s2496 = scalar_lea.vmem [#allocation1], 1
    %v2497 = vld [vmem:[%s2496] ss:$2 sm:$0xff]
    %s2498 = scalar_lea.vmem [#allocation1], 17
    %v2499 = vld [vmem:[%s2498] ss:$2 sm:$0xff]
    %v2502 = vadd.f32 %v2481, %v2497
    %v2503 = vadd.f32 %v2482, %v2499
    %2504 = vst [vmem:[#allocation4] sm:$0xff] %v2502
    %2505 = vst [vmem:[#allocation4 + $0x8] sm:$0xff] %v2503
    // Predicated region
    $region30: #{tpu_custom_call.1} parent=1 // pred_check
      _
    $region31: #{tpu_custom_call.1} parent=1 // pred_check_branch
      %2507 = sbr.rel (0) target = $region33
    $region32: #{tpu_custom_call.1} parent=1 // pred_region
      %2509 = vsyncadd [#allocation5], 0
      %s2511 = sshll.u32 [#allocation4], 4
      %s2512 = int_to_ptr.vmem [resolvable:$true] %s2511
      %s2513 = sshll.u32 %s7, 4
      %s2514 = int_to_ptr.hbm [resolvable:$true] %s2513
      %2516 = dma.vmem_to_hbm [thread:$0]  %s2512, 256, %s2514, [#allocation5]
    $region33: #{tpu_custom_call.1} parent=1 // pred_fallthru
      _
    // Predicated region
    $region34: #{tpu_custom_call.1} parent=1 // pred_check
      _
    $region35: #{tpu_custom_call.1} parent=1 // pred_check_branch
      %2518 = sbr.rel (0) target = $region37
    $region36: #{tpu_custom_call.1} parent=1 // pred_region
      %2520 = dma.done [#allocation5], 256
    $region37: #{tpu_custom_call.1} parent=1 // pred_fallthru
      _
    %2521 = vsyncpa [#allocation5], 1

</llo_original>
